<compile_context>
chip_gen: v7x
topology: tpu7x:2x2x1
jax: 0.10.0
libtpu: 0.0.40
codegen_flags: <defaults>
</compile_context>

<pallas_src>
import jax
import jax.numpy as jnp
from jax import lax
from jax.experimental import pallas as pl
from jax.experimental.pallas import tpu as pltpu


# ---------------------------------------------------------------------------
# Generation-aware VMEM budgets.
# ---------------------------------------------------------------------------
def _vmem_budgets():
    """Returns (vmem_limit_bytes, fused_path_budget_bytes) for this TPU."""
    cap = 128 * 1024 * 1024
    try:
        info = pltpu.get_tpu_info()
        cap = int(getattr(info, "vmem_capacity_bytes", cap) or cap)
    except Exception:
        pass
    if cap >= 96 * 1024 * 1024:            # v5e / v6e: 128 MiB physical VMEM
        return 100 * 1024 * 1024, 72 * 1024 * 1024
    # v7x-class: 64 MiB physical -- leave headroom for double buffers.
    return 48 * 1024 * 1024, 32 * 1024 * 1024


def _pick_tn(H, weight_itemsize, vmem_limit):
    """Output-tile width: multiple of 256 (v6e/v7x MXU), divides H, and the
    double-buffered (H, tn) weight block stays well under the VMEM limit."""
    for tn in (1024, 512, 256):
        if H % tn == 0 and 2 * H * tn * weight_itemsize <= vmem_limit // 2:
            return tn
    return 256 if H % 256 == 0 else H


# ---------------------------------------------------------------------------
# Path A: whole chain fused into a single grid step (chain fits VMEM).
# ---------------------------------------------------------------------------
def _fused_chain_kernel(x_ref, w_ref, b_ref, o_ref):
    """All layer weights resident in VMEM; fully unrolled layer loop."""
    num_layers = w_ref.shape[0]
    act = x_ref[...].astype(jnp.float32)
    for l in range(num_layers):                      # static unroll
        h = jnp.dot(act.astype(w_ref.dtype), w_ref[l],
                    preferred_element_type=jnp.float32)
        act = jnp.maximum(h + b_ref[l:l + 1, :], 0.0)   # (1, H) broadcast
    o_ref[...] = act.astype(o_ref.dtype)


# ---------------------------------------------------------------------------
# Path B: per-layer grid, N-tiled weights, ping-pong activation scratch.
# ---------------------------------------------------------------------------
def _make_layer_tiled_kernel(n_tiles, tn):
    def kernel(x_ref, w_ref, b_ref, o_ref, act_ref):
        # grid = (batch_tiles, L, n_tiles)
        l = pl.program_id(1)
        j = pl.program_id(2)
        num_layers = pl.num_programs(1)

        # Load this batch tile's input into ping-pong buffer 0 (once per bi).
        @pl.when((l == 0) & (j == 0))
        def _():
            for k in range(n_tiles):                 # static lane slices
                act_ref[0, k] = x_ref[:, k * tn:(k + 1) * tn].astype(jnp.float32)

        read = l % 2
        write = (l + 1) % 2

        tb = x_ref.shape[0]
        acc = jnp.zeros((tb, tn), dtype=jnp.float32)
        for k in range(n_tiles):                     # K-chunked MXU matmul
            a = act_ref[read, k].astype(w_ref.dtype)
            acc = acc + jnp.dot(a, w_ref[k * tn:(k + 1) * tn, :],
                                preferred_element_type=jnp.float32)
        h = jnp.maximum(acc + b_ref[...], 0.0)       # bias block (1, tn)
        act_ref[write, j] = h                        # dynamic leading indices only

        @pl.when(l == num_layers - 1)
        def _():
            o_ref[...] = h.astype(o_ref.dtype)

    return kernel


# ---------------------------------------------------------------------------
# Wrapper
# ---------------------------------------------------------------------------
def tree_forward(x, weights, biases, *,
                 weight_dtype=jnp.bfloat16,
                 force_layer_grid=False,
                 batch_tile=None,
                 tile_n=None,
                 weight_buffers=2):
    """Fused leaf->root chain.  x: [B,H], weights: [L,H,H], biases: [L,H]."""
    # TODO(synk): fp8 (v7x) / int8-int4 (v5e/v6e) weight path with per-layer
    # scales for the HBM-bound weight-streaming regime.
    B, H = x.shape
    L = weights.shape[0]
    assert weights.shape == (L, H, H) and biases.shape == (L, H)
    assert B % 8 == 0 and H % 128 == 0, "B must be a multiple of 8, H of 128"

    vmem_limit, fused_budget = _vmem_budgets()

    w = weights.astype(weight_dtype)          # bf16 by default: MXU-native, 1/2 HBM traffic
    w_itemsize = jnp.dtype(weight_dtype).itemsize
    w_bytes = L * H * H * w_itemsize
    x_bytes = B * H * x.dtype.itemsize

    cost = pl.CostEstimate(
        flops=2 * B * H * H * L,
        transcendentals=0,
        bytes_accessed=w_bytes + L * H * 4 + 2 * x_bytes,
    )

    # Real resident footprint of the fused path (everything single-buffered):
    bias_resident = pl.cdiv(L, 8) * 8 * H * 4          # (L,H) sublane-padded
    act_tmp = 4 * B * H * 4                            # in-kernel f32/bf16 temporaries
    fused_footprint = w_bytes + bias_resident + 2 * x_bytes + act_tmp

    if (not force_layer_grid) and fused_footprint <= fused_budget:
        # --- Path A: single-step fused kernel ------------------------------
        b2d = biases.astype(jnp.float32)               # (L, H)
        return pl.pallas_call(
            _fused_chain_kernel,
            out_shape=jax.ShapeDtypeStruct((B, H), x.dtype),
            grid_spec=pltpu.PrefetchScalarGridSpec(
                num_scalar_prefetch=0,
                grid=(1,),
                in_specs=[
                    pl.BlockSpec((B, H), lambda i: (0, 0),
                                 pipeline_mode=pl.Buffered(1)),
                    pl.BlockSpec((L, H, H), lambda i: (0, 0, 0),
                                 pipeline_mode=pl.Buffered(1)),
                    pl.BlockSpec((L, H), lambda i: (0, 0),
                                 pipeline_mode=pl.Buffered(1)),
                ],
                out_specs=pl.BlockSpec((B, H), lambda i: (0, 0),
                                       pipeline_mode=pl.Buffered(1)),
            ),
            compiler_params=pltpu.CompilerParams(
                dimension_semantics=("arbitrary",),
                vmem_limit_bytes=vmem_limit),
            cost_estimate=cost,
        )(x, w, b2d)

    # --- Path B: streamed, N-tiled per-layer grid --------------------------
    tn = tile_n if tile_n is not None else _pick_tn(H, w_itemsize, vmem_limit)
    assert H % tn == 0 and tn % 128 == 0
    n_tiles = H // tn

    # TODO(synk): auto-gate batch_tile on the compute-bound regime
    # (roughly B >~ 300 on v7x, >~ 650 on v6e) and on core count; each batch
    # tile re-streams the full weight stack, so it hurts when HBM-bound.
    tb = B if batch_tile is None else batch_tile
    assert B % tb == 0 and tb % 8 == 0
    n_b = B // tb

    # (L, 1, H) keeps the per-step bias block (1, tn) layout-legal; the 8x
    # sublane padding only costs one 8*tn*4 block per step here (streamed).
    b3d = biases.astype(jnp.float32).reshape(L, 1, H)
    kernel = _make_layer_tiled_kernel(n_tiles, tn)

    # TODO(synk): sweep weight_buffers=3 once per-step compute << weight DMA.
    return pl.pallas_call(
        kernel,
        out_shape=jax.ShapeDtypeStruct((B, H), x.dtype),
        grid_spec=pltpu.PrefetchScalarGridSpec(
            num_scalar_prefetch=0,
            grid=(n_b, L, n_tiles),
            in_specs=[
                pl.BlockSpec((tb, H), lambda bi, l, j: (bi, 0),
                             pipeline_mode=pl.Buffered(1)),           # x: read once
                pl.BlockSpec((pl.Squeezed(), H, tn),
                             lambda bi, l, j: (l, 0, j),
                             pipeline_mode=pl.Buffered(weight_buffers)),
                pl.BlockSpec((pl.Squeezed(), 1, tn),
                             lambda bi, l, j: (l, 0, j)),
            ],
            out_specs=pl.BlockSpec((tb, tn), lambda bi, l, j: (bi, j)),
            scratch_shapes=[pltpu.VMEM((2, n_tiles, tb, tn), jnp.float32)],
        ),
        compiler_params=pltpu.CompilerParams(
            dimension_semantics=("parallel", "arbitrary", "arbitrary"),
            vmem_limit_bytes=vmem_limit),
        cost_estimate=cost,
    )(x, w, b3d)


class TreeNode:
    """Mirrors the PyTorch TreeNode: forward = parent(self.module(x)) until root."""

    def __init__(self, weight, bias, root=False):
        self.weight = weight      # this node's "module" = Linear(H,H) + ReLU
        self.bias = bias
        self.parent = None
        self.root = root

    def set_parent(self, parent_node):
        self.parent = parent_node

    def _chain_params(self):
        ws, bs = [self.weight], [self.bias]
        node = self
        while not node.root:
            node = node.parent
            ws.append(node.weight)
            bs.append(node.bias)
        return jnp.stack(ws), jnp.stack(bs)

    def __call__(self, x):
        ws, bs = self._chain_params()
        return tree_forward(x, ws, bs)


def _reference_f32(x, weights, biases):
    """True f32 reference (highest-precision matmuls)."""
    h = x.astype(jnp.float32)
    for l in range(weights.shape[0]):
        h = jnp.dot(h, weights[l].astype(jnp.float32),
                    precision=lax.Precision.HIGHEST,
                    preferred_element_type=jnp.float32)
        h = jnp.maximum(h + biases[l].astype(jnp.float32), 0.0)
    return h.astype(x.dtype)


if __name__ == "__main__":
    B, H, DEPTH = 16, 512, 3     # small, (8,128)-aligned; leaf -> mid -> root

    key = jax.random.PRNGKey(0)
    kx, kw, kb = jax.random.split(key, 3)

    x = jax.random.normal(kx, (B, H), dtype=jnp.float32)
    scale = 1.0 / jnp.sqrt(jnp.float32(H))
    w_stack = jax.random.normal(kw, (DEPTH, H, H), dtype=jnp.float32) * scale
    b_stack = jax.random.normal(kb, (DEPTH, H), dtype=jnp.float32) * 0.1

    # Build the tree: leaf -> mid -> root (same composition order as PyTorch).
    root = TreeNode(w_stack[2], b_stack[2], root=True)
    mid = TreeNode(w_stack[1], b_stack[1])
    leaf = TreeNode(w_stack[0], b_stack[0])
    mid.set_parent(root)
    leaf.set_parent(mid)

    ref = _reference_f32(x, w_stack, b_stack)

    # Fused single-step path (auto-selected at these shapes).
    out_fused = jax.block_until_ready(leaf(x))
    assert out_fused.shape == (B, H) and out_fused.dtype == x.dtype
    assert jnp.allclose(out_fused, ref, atol=5e-2, rtol=5e-2), \
        "fused path vs f32 reference mismatch"

    # Streamed N-tiled path (tile_n=256 -> 2 output tiles, ping-pong scratch).
    out_layered = jax.block_until_ready(
        tree_forward(x, w_stack, b_stack, force_layer_grid=True, tile_n=256))
    assert out_layered.shape == (B, H) and out_layered.dtype == x.dtype
    assert jnp.allclose(out_layered, ref, atol=5e-2, rtol=5e-2), \
        "streamed path vs f32 reference mismatch"
    assert jnp.allclose(out_fused, out_layered, atol=1e-3, rtol=1e-3), \
        "fused vs streamed path mismatch"

    print("KERNEL_OK")
</pallas_src>

<mosaic_0001>
module attributes {stable_mosaic.version = 11 : i64} {
  func.func @_fused_chain_kernel(%arg0: i32, %arg1: memref<16x512xf32, #tpu.memory_space<vmem>>, %arg2: memref<3x512x512xbf16, #tpu.memory_space<vmem>>, %arg3: memref<3x512xf32, #tpu.memory_space<vmem>>, %arg4: memref<16x512xf32, #tpu.memory_space<vmem>>) attributes {dimension_semantics = [#tpu.dimension_semantics<arbitrary>], iteration_bounds = array<i64: 1>, scalar_prefetch = 0 : i64, scratch_operands = 0 : i64, tpu.core_type = #tpu.core_type<tc>, window_params = [{pipeline_mode = #tpu.pipeline_mode<synchronous>, transform_indices = @transform_0, window_bounds = array<i64: 16, 512>}, {pipeline_mode = #tpu.pipeline_mode<synchronous>, transform_indices = @transform_1, window_bounds = array<i64: 3, 512, 512>}, {pipeline_mode = #tpu.pipeline_mode<synchronous>, transform_indices = @transform_2, window_bounds = array<i64: 3, 512>}, {pipeline_mode = #tpu.pipeline_mode<synchronous>, transform_indices = @transform_3, window_bounds = array<i64: 16, 512>}]} {
    %c0 = arith.constant 0 : index
    %c0_0 = arith.constant 0 : index
    %0 = vector.load %arg1[%c0, %c0_0] : memref<16x512xf32, #tpu.memory_space<vmem>>, vector<16x512xf32>
    %1 = arith.truncf %0 : vector<16x512xf32> to vector<16x512xbf16>
    %c0_1 = arith.constant 0 : index
    %c0_2 = arith.constant 0 : index
    %c0_3 = arith.constant 0 : index
    %2 = vector.load %arg2[%c0_1, %c0_2, %c0_3] : memref<3x512x512xbf16, #tpu.memory_space<vmem>>, vector<1x512x512xbf16>
    %3 = vector.shape_cast %2 : vector<1x512x512xbf16> to vector<512x512xbf16>
    %cst = arith.constant dense<0.000000e+00> : vector<16x512xf32>
    %4 = tpu.matmul %1, %3, %cst {dimension_numbers = #tpu.dot_dimension_numbers<[1], [0], [0], [1], [0, 0, 1, 1], [], []>} : vector<16x512xbf16>, vector<512x512xbf16>, vector<16x512xf32> -> vector<16x512xf32>
    %c0_4 = arith.constant 0 : index
    %c0_5 = arith.constant 0 : index
    %5 = vector.load %arg3[%c0_4, %c0_5] : memref<3x512xf32, #tpu.memory_space<vmem>>, vector<1x512xf32>
    %6 = vector.broadcast %5 : vector<1x512xf32> to vector<16x512xf32>
    %7 = arith.addf %4, %6 : vector<16x512xf32>
    %cst_6 = arith.constant 0.000000e+00 : f32
    %8 = vector.broadcast %cst_6 : f32 to vector<16x512xf32>
    %9 = arith.maximumf %7, %8 : vector<16x512xf32>
    %10 = arith.truncf %9 : vector<16x512xf32> to vector<16x512xbf16>
    %c1 = arith.constant 1 : index
    %c0_7 = arith.constant 0 : index
    %c0_8 = arith.constant 0 : index
    %11 = vector.load %arg2[%c1, %c0_7, %c0_8] : memref<3x512x512xbf16, #tpu.memory_space<vmem>>, vector<1x512x512xbf16>
    %12 = vector.shape_cast %11 : vector<1x512x512xbf16> to vector<512x512xbf16>
    %cst_9 = arith.constant dense<0.000000e+00> : vector<16x512xf32>
    %13 = tpu.matmul %10, %12, %cst_9 {dimension_numbers = #tpu.dot_dimension_numbers<[1], [0], [0], [1], [0, 0, 1, 1], [], []>} : vector<16x512xbf16>, vector<512x512xbf16>, vector<16x512xf32> -> vector<16x512xf32>
    %c1_10 = arith.constant 1 : index
    %c0_11 = arith.constant 0 : index
    %14 = vector.load %arg3[%c1_10, %c0_11] : memref<3x512xf32, #tpu.memory_space<vmem>>, vector<1x512xf32>
    %15 = vector.broadcast %14 : vector<1x512xf32> to vector<16x512xf32>
    %16 = arith.addf %13, %15 : vector<16x512xf32>
    %cst_12 = arith.constant 0.000000e+00 : f32
    %17 = vector.broadcast %cst_12 : f32 to vector<16x512xf32>
    %18 = arith.maximumf %16, %17 : vector<16x512xf32>
    %19 = arith.truncf %18 : vector<16x512xf32> to vector<16x512xbf16>
    %c2 = arith.constant 2 : index
    %c0_13 = arith.constant 0 : index
    %c0_14 = arith.constant 0 : index
    %20 = vector.load %arg2[%c2, %c0_13, %c0_14] : memref<3x512x512xbf16, #tpu.memory_space<vmem>>, vector<1x512x512xbf16>
    %21 = vector.shape_cast %20 : vector<1x512x512xbf16> to vector<512x512xbf16>
    %cst_15 = arith.constant dense<0.000000e+00> : vector<16x512xf32>
    %22 = tpu.matmul %19, %21, %cst_15 {dimension_numbers = #tpu.dot_dimension_numbers<[1], [0], [0], [1], [0, 0, 1, 1], [], []>} : vector<16x512xbf16>, vector<512x512xbf16>, vector<16x512xf32> -> vector<16x512xf32>
    %c2_16 = arith.constant 2 : index
    %c0_17 = arith.constant 0 : index
    %23 = vector.load %arg3[%c2_16, %c0_17] : memref<3x512xf32, #tpu.memory_space<vmem>>, vector<1x512xf32>
    %24 = vector.broadcast %23 : vector<1x512xf32> to vector<16x512xf32>
    %25 = arith.addf %22, %24 : vector<16x512xf32>
    %cst_18 = arith.constant 0.000000e+00 : f32
    %26 = vector.broadcast %cst_18 : f32 to vector<16x512xf32>
    %27 = arith.maximumf %25, %26 : vector<16x512xf32>
    %c0_19 = arith.constant 0 : index
    %c0_20 = arith.constant 0 : index
    %28 = vector.load %arg4[%c0_19, %c0_20] : memref<16x512xf32, #tpu.memory_space<vmem>>, vector<16x512xf32>
    tpu.vector_store %arg4[%c0_19, %c0_20], %27 {strides = array<i32>} : memref<16x512xf32, #tpu.memory_space<vmem>>, vector<16x512xf32>,
    return
  }
  func.func @transform_0(%arg0: i32) -> (i32, i32) {
    %c0_i32 = arith.constant 0 : i32
    %c0_i32_0 = arith.constant 0 : i32
    %c0_i32_1 = arith.constant 0 : i32
    return %c0_i32, %c0_i32_0 : i32, i32
  }
  func.func @transform_1(%arg0: i32) -> (i32, i32, i32) {
    %c0_i32 = arith.constant 0 : i32
    %c0_i32_0 = arith.constant 0 : i32
    %c0_i32_1 = arith.constant 0 : i32
    %c0_i32_2 = arith.constant 0 : i32
    return %c0_i32, %c0_i32_0, %c0_i32_1 : i32, i32, i32
  }
  func.func @transform_2(%arg0: i32) -> (i32, i32) {
    %c0_i32 = arith.constant 0 : i32
    %c0_i32_0 = arith.constant 0 : i32
    %c0_i32_1 = arith.constant 0 : i32
    return %c0_i32, %c0_i32_0 : i32, i32
  }
  func.func @transform_3(%arg0: i32) -> (i32, i32) {
    %c0_i32 = arith.constant 0 : i32
    %c0_i32_0 = arith.constant 0 : i32
    %c0_i32_1 = arith.constant 0 : i32
    return %c0_i32, %c0_i32_0 : i32, i32
  }
}

</mosaic_0001>

<llo_original>
// kernel: tpu_custom_call.1
$region0: #{tpu_custom_call.1}
  #allocation0 [shape = 'u32[]', space=smem, size = 0x4, offset = 0x4, fixed_abs, tag = 'smem constant byte address 0x4 - core index']
  #allocation1 [shape = 'u32[144,128]{1,0:T(1,128)}', space=vmem, size = 0x12000, scoped, tag = 'internal scratch']
  %s0 = inlined_call_operand.hbm [shape: f32[16,512], index: 0, kind: input, shape index: {}]
  %s1 = inlined_call_operand.hbm [shape: bf16[3,512,512], index: 1, kind: input, shape index: {}]
  %s2 = inlined_call_operand.hbm [shape: f32[3,512], index: 2, kind: input, shape index: {}]
  %s3 = inlined_call_operand.hbm [shape: f32[16,512], index: 3, kind: output, shape index: {}]
  %s4 = sld [smem:[#allocation0]]
  $region34: #{tpu_custom_call.1} parent=0
    _
  %s6 = ssub.s32 1, %s4
  %s7 = scalar_select 0, %s6, %s4
  $region1: #{tpu_custom_call.1} parent=0
    #allocation2 [shape = 'u8[32768]{0}', space=vmem, size = 0x8000, scoped, tag = 'input window, operand 0, single buffered']
    #allocation3 [shape = 's32[1]{0}', space=sflag, size = 0x4, scoped, tag = 'scoped memory for tpu_custom_call.1']
    #allocation4 [shape = 's32[1]{0}', space=sflag, size = 0x4, scoped, tag = 'scoped memory for tpu_custom_call.1']
    #allocation5 [shape = 'u8[1572864]{0}', space=vmem, size = 0x180000, scoped, tag = 'input window, operand 1, single buffered']
    #allocation6 [shape = 's32[1]{0}', space=sflag, size = 0x4, scoped, tag = 'scoped memory for tpu_custom_call.1']
    #allocation7 [shape = 'u8[8192]{0}', space=vmem, size = 0x2000, scoped, tag = 'input window, operand 2, single buffered']
    #allocation8 [shape = 'u8[32768]{0}', space=vmem, size = 0x8000, scoped, tag = 'output window, operand 0, single buffered']
    %8 = vsyncpa [#allocation3], 0
    %9 = vsyncpa [#allocation6], 0
    %10 = vsyncpa [#allocation4], 0
    // Predicated region
    $region2: #{tpu_custom_call.1} parent=1 // pred_check
      _
    $region3: #{tpu_custom_call.1} parent=1 // pred_check_branch
      %12 = sbr.rel (0) target = $region5
    $region4: #{tpu_custom_call.1} parent=1 // pred_region
      %s14 = ssub.s32 1024, 1024
      %15 = vsyncadd [#allocation3], %s14
      %s16 = sshll.u32 [#allocation2], 4
      %s17 = int_to_ptr.vmem [resolvable:$true] %s16
      %22 = dma.hbm_to_vmem [thread:$0]  %s0, 1024, %s17, [#allocation3], 512, 512, 32
    $region5: #{tpu_custom_call.1} parent=1 // pred_fallthru
      _
    // Predicated region
    $region6: #{tpu_custom_call.1} parent=1 // pred_check
      _
    $region7: #{tpu_custom_call.1} parent=1 // pred_check_branch
      %24 = sbr.rel (0) target = $region9
    $region8: #{tpu_custom_call.1} parent=1 // pred_region
      %s26 = ssub.s32 49152, 49152
      %27 = vsyncadd [#allocation6], %s26
      %s28 = sshll.u32 [#allocation5], 4
      %s29 = int_to_ptr.vmem [resolvable:$true] %s28
      %34 = dma.hbm_to_vmem [thread:$0]  %s1, 49152, %s29, [#allocation6], 256, 256, 16
    $region9: #{tpu_custom_call.1} parent=1 // pred_fallthru
      _
    // Predicated region
    $region10: #{tpu_custom_call.1} parent=1 // pred_check
      _
    $region11: #{tpu_custom_call.1} parent=1 // pred_check_branch
      %36 = sbr.rel (0) target = $region13
    $region12: #{tpu_custom_call.1} parent=1 // pred_region
      %s38 = ssub.s32 256, 256
      %39 = vsyncadd [#allocation6], %s38
      %s41 = sshll.u32 [#allocation7], 4
      %s42 = int_to_ptr.vmem [resolvable:$true] %s41
      %44 = dma.hbm_to_vmem [thread:$0]  %s2, 256, %s42, [#allocation6]
    $region13: #{tpu_custom_call.1} parent=1 // pred_fallthru
      _
    // Predicated region
    $region14: #{tpu_custom_call.1} parent=1 // pred_check
      _
    $region15: #{tpu_custom_call.1} parent=1 // pred_check_branch
      %46 = sbr.rel (0) target = $region17
    $region16: #{tpu_custom_call.1} parent=1 // pred_region
      %47 = dma.done [#allocation3], 1024
    $region17: #{tpu_custom_call.1} parent=1 // pred_fallthru
      _
    // Predicated region
    $region18: #{tpu_custom_call.1} parent=1 // pred_check
      _
    $region19: #{tpu_custom_call.1} parent=1 // pred_check_branch
      %49 = sbr.rel (0) target = $region21
    $region20: #{tpu_custom_call.1} parent=1 // pred_region
      %50 = dma.done [#allocation6], 49152
    $region21: #{tpu_custom_call.1} parent=1 // pred_fallthru
      _
    // Predicated region
    $region22: #{tpu_custom_call.1} parent=1 // pred_check
      _
    $region23: #{tpu_custom_call.1} parent=1 // pred_check_branch
      %52 = sbr.rel (0) target = $region25
    $region24: #{tpu_custom_call.1} parent=1 // pred_region
      %53 = dma.done [#allocation6], 256
    $region25: #{tpu_custom_call.1} parent=1 // pred_fallthru
      _
    %v54 = vld [vmem:[#allocation2] sm:$0xff]
    %v55 = vld [vmem:[#allocation2 + $0x8] sm:$0xff]
    %v56 = vld [vmem:[#allocation2 + $0x10] sm:$0xff]
    %v57 = vld [vmem:[#allocation2 + $0x18] sm:$0xff]
    %v58 = vld [vmem:[#allocation2 + $0x20] sm:$0xff]
    %v59 = vld [vmem:[#allocation2 + $0x28] sm:$0xff]
    %v60 = vld [vmem:[#allocation2 + $0x30] sm:$0xff]
    %v61 = vld [vmem:[#allocation2 + $0x38] sm:$0xff]
    %v62 = vpack.c.bf16 %v58, %v54
    %v63 = vpack.c.bf16 %v59, %v55
    %v64 = vpack.c.bf16 %v60, %v56
    %v65 = vpack.c.bf16 %v61, %v57
    %v66 = vld [vmem:[#allocation5] sm:$0xff]
    %v67 = vld [vmem:[#allocation5 + $0x8] sm:$0xff]
    %v68 = vld [vmem:[#allocation5 + $0x10] sm:$0xff]
    %v69 = vld [vmem:[#allocation5 + $0x18] sm:$0xff]
    %v70 = vld [vmem:[#allocation5 + $0x20] sm:$0xff]
    %v71 = vld [vmem:[#allocation5 + $0x28] sm:$0xff]
    %v72 = vld [vmem:[#allocation5 + $0x30] sm:$0xff]
    %v73 = vld [vmem:[#allocation5 + $0x38] sm:$0xff]
    %v74 = vld [vmem:[#allocation5 + $0x40] sm:$0xff]
    %v75 = vld [vmem:[#allocation5 + $0x48] sm:$0xff]
    %v76 = vld [vmem:[#allocation5 + $0x50] sm:$0xff]
    %v77 = vld [vmem:[#allocation5 + $0x58] sm:$0xff]
    %v78 = vld [vmem:[#allocation5 + $0x60] sm:$0xff]
    %v79 = vld [vmem:[#allocation5 + $0x68] sm:$0xff]
    %v80 = vld [vmem:[#allocation5 + $0x70] sm:$0xff]
    %v81 = vld [vmem:[#allocation5 + $0x78] sm:$0xff]
    %v82 = vld [vmem:[#allocation5 + $0x80] sm:$0xff]
    %v83 = vld [vmem:[#allocation5 + $0x88] sm:$0xff]
    %v84 = vld [vmem:[#allocation5 + $0x90] sm:$0xff]
    %v85 = vld [vmem:[#allocation5 + $0x98] sm:$0xff]
    %v86 = vld [vmem:[#allocation5 + $0xa0] sm:$0xff]
    %v87 = vld [vmem:[#allocation5 + $0xa8] sm:$0xff]
    %v88 = vld [vmem:[#allocation5 + $0xb0] sm:$0xff]
    %v89 = vld [vmem:[#allocation5 + $0xb8] sm:$0xff]
    %v90 = vld [vmem:[#allocation5 + $0xc0] sm:$0xff]
    %v91 = vld [vmem:[#allocation5 + $0xc8] sm:$0xff]
    %v92 = vld [vmem:[#allocation5 + $0xd0] sm:$0xff]
    %v93 = vld [vmem:[#allocation5 + $0xd8] sm:$0xff]
    %v94 = vld [vmem:[#allocation5 + $0xe0] sm:$0xff]
    %v95 = vld [vmem:[#allocation5 + $0xe8] sm:$0xff]
    %v96 = vld [vmem:[#allocation5 + $0xf0] sm:$0xff]
    %v97 = vld [vmem:[#allocation5 + $0xf8] sm:$0xff]
    %v98 = vld [vmem:[#allocation5 + $0x100] sm:$0xff]
    %v99 = vld [vmem:[#allocation5 + $0x108] sm:$0xff]
    %v100 = vld [vmem:[#allocation5 + $0x110] sm:$0xff]
    %v101 = vld [vmem:[#allocation5 + $0x118] sm:$0xff]
    %v102 = vld [vmem:[#allocation5 + $0x120] sm:$0xff]
    %v103 = vld [vmem:[#allocation5 + $0x128] sm:$0xff]
    %v104 = vld [vmem:[#allocation5 + $0x130] sm:$0xff]
    %v105 = vld [vmem:[#allocation5 + $0x138] sm:$0xff]
    %v106 = vld [vmem:[#allocation5 + $0x140] sm:$0xff]
    %v107 = vld [vmem:[#allocation5 + $0x148] sm:$0xff]
    %v108 = vld [vmem:[#allocation5 + $0x150] sm:$0xff]
    %v109 = vld [vmem:[#allocation5 + $0x158] sm:$0xff]
    %v110 = vld [vmem:[#allocation5 + $0x160] sm:$0xff]
    %v111 = vld [vmem:[#allocation5 + $0x168] sm:$0xff]
    %v112 = vld [vmem:[#allocation5 + $0x170] sm:$0xff]
    %v113 = vld [vmem:[#allocation5 + $0x178] sm:$0xff]
    %v114 = vld [vmem:[#allocation5 + $0x180] sm:$0xff]
    %v115 = vld [vmem:[#allocation5 + $0x188] sm:$0xff]
    %v116 = vld [vmem:[#allocation5 + $0x190] sm:$0xff]
    %v117 = vld [vmem:[#allocation5 + $0x198] sm:$0xff]
    %v118 = vld [vmem:[#allocation5 + $0x1a0] sm:$0xff]
    %v119 = vld [vmem:[#allocation5 + $0x1a8] sm:$0xff]
    %v120 = vld [vmem:[#allocation5 + $0x1b0] sm:$0xff]
    %v121 = vld [vmem:[#allocation5 + $0x1b8] sm:$0xff]
    %v122 = vld [vmem:[#allocation5 + $0x1c0] sm:$0xff]
    %v123 = vld [vmem:[#allocation5 + $0x1c8] sm:$0xff]
    %v124 = vld [vmem:[#allocation5 + $0x1d0] sm:$0xff]
    %v125 = vld [vmem:[#allocation5 + $0x1d8] sm:$0xff]
    %v126 = vld [vmem:[#allocation5 + $0x1e0] sm:$0xff]
    %v127 = vld [vmem:[#allocation5 + $0x1e8] sm:$0xff]
    %v128 = vld [vmem:[#allocation5 + $0x1f0] sm:$0xff]
    %v129 = vld [vmem:[#allocation5 + $0x1f8] sm:$0xff]
    %v130 = vld [vmem:[#allocation5 + $0x200] sm:$0xff]
    %v131 = vld [vmem:[#allocation5 + $0x208] sm:$0xff]
    %v132 = vld [vmem:[#allocation5 + $0x210] sm:$0xff]
    %v133 = vld [vmem:[#allocation5 + $0x218] sm:$0xff]
    %v134 = vld [vmem:[#allocation5 + $0x220] sm:$0xff]
    %v135 = vld [vmem:[#allocation5 + $0x228] sm:$0xff]
    %v136 = vld [vmem:[#allocation5 + $0x230] sm:$0xff]
    %v137 = vld [vmem:[#allocation5 + $0x238] sm:$0xff]
    %v138 = vld [vmem:[#allocation5 + $0x240] sm:$0xff]
    %v139 = vld [vmem:[#allocation5 + $0x248] sm:$0xff]
    %v140 = vld [vmem:[#allocation5 + $0x250] sm:$0xff]
    %v141 = vld [vmem:[#allocation5 + $0x258] sm:$0xff]
    %v142 = vld [vmem:[#allocation5 + $0x260] sm:$0xff]
    %v143 = vld [vmem:[#allocation5 + $0x268] sm:$0xff]
    %v144 = vld [vmem:[#allocation5 + $0x270] sm:$0xff]
    %v145 = vld [vmem:[#allocation5 + $0x278] sm:$0xff]
    %v146 = vld [vmem:[#allocation5 + $0x280] sm:$0xff]
    %v147 = vld [vmem:[#allocation5 + $0x288] sm:$0xff]
    %v148 = vld [vmem:[#allocation5 + $0x290] sm:$0xff]
    %v149 = vld [vmem:[#allocation5 + $0x298] sm:$0xff]
    %v150 = vld [vmem:[#allocation5 + $0x2a0] sm:$0xff]
    %v151 = vld [vmem:[#allocation5 + $0x2a8] sm:$0xff]
    %v152 = vld [vmem:[#allocation5 + $0x2b0] sm:$0xff]
    %v153 = vld [vmem:[#allocation5 + $0x2b8] sm:$0xff]
    %v154 = vld [vmem:[#allocation5 + $0x2c0] sm:$0xff]
    %v155 = vld [vmem:[#allocation5 + $0x2c8] sm:$0xff]
    %v156 = vld [vmem:[#allocation5 + $0x2d0] sm:$0xff]
    %v157 = vld [vmem:[#allocation5 + $0x2d8] sm:$0xff]
    %v158 = vld [vmem:[#allocation5 + $0x2e0] sm:$0xff]
    %v159 = vld [vmem:[#allocation5 + $0x2e8] sm:$0xff]
    %v160 = vld [vmem:[#allocation5 + $0x2f0] sm:$0xff]
    %v161 = vld [vmem:[#allocation5 + $0x2f8] sm:$0xff]
    %v162 = vld [vmem:[#allocation5 + $0x300] sm:$0xff]
    %v163 = vld [vmem:[#allocation5 + $0x308] sm:$0xff]
    %v164 = vld [vmem:[#allocation5 + $0x310] sm:$0xff]
    %v165 = vld [vmem:[#allocation5 + $0x318] sm:$0xff]
    %v166 = vld [vmem:[#allocation5 + $0x320] sm:$0xff]
    %v167 = vld [vmem:[#allocation5 + $0x328] sm:$0xff]
    %v168 = vld [vmem:[#allocation5 + $0x330] sm:$0xff]
    %v169 = vld [vmem:[#allocation5 + $0x338] sm:$0xff]
    %v170 = vld [vmem:[#allocation5 + $0x340] sm:$0xff]
    %v171 = vld [vmem:[#allocation5 + $0x348] sm:$0xff]
    %v172 = vld [vmem:[#allocation5 + $0x350] sm:$0xff]
    %v173 = vld [vmem:[#allocation5 + $0x358] sm:$0xff]
    %v174 = vld [vmem:[#allocation5 + $0x360] sm:$0xff]
    %v175 = vld [vmem:[#allocation5 + $0x368] sm:$0xff]
    %v176 = vld [vmem:[#allocation5 + $0x370] sm:$0xff]
    %v177 = vld [vmem:[#allocation5 + $0x378] sm:$0xff]
    %v178 = vld [vmem:[#allocation5 + $0x380] sm:$0xff]
    %v179 = vld [vmem:[#allocation5 + $0x388] sm:$0xff]
    %v180 = vld [vmem:[#allocation5 + $0x390] sm:$0xff]
    %v181 = vld [vmem:[#allocation5 + $0x398] sm:$0xff]
    %v182 = vld [vmem:[#allocation5 + $0x3a0] sm:$0xff]
    %v183 = vld [vmem:[#allocation5 + $0x3a8] sm:$0xff]
    %v184 = vld [vmem:[#allocation5 + $0x3b0] sm:$0xff]
    %v185 = vld [vmem:[#allocation5 + $0x3b8] sm:$0xff]
    %v186 = vld [vmem:[#allocation5 + $0x3c0] sm:$0xff]
    %v187 = vld [vmem:[#allocation5 + $0x3c8] sm:$0xff]
    %v188 = vld [vmem:[#allocation5 + $0x3d0] sm:$0xff]
    %v189 = vld [vmem:[#allocation5 + $0x3d8] sm:$0xff]
    %v190 = vld [vmem:[#allocation5 + $0x3e0] sm:$0xff]
    %v191 = vld [vmem:[#allocation5 + $0x3e8] sm:$0xff]
    %v192 = vld [vmem:[#allocation5 + $0x3f0] sm:$0xff]
    %v193 = vld [vmem:[#allocation5 + $0x3f8] sm:$0xff]
    %v194 = vld [vmem:[#allocation7] ss:$4 sm:$0xf]
    %v196 = vlaneseq
    %v197 = vshrl.u32 %v196, 7
    %v198 = vsub.s32 0, %v197
    %v199 = vrot.slane %v194, %v198
    %v200 = vlaneseq
    %v201 = vshrl.u32 %v200, 7
    %v202 = vsub.s32 1, %v201
    %v203 = vrot.slane %v194, %v202
    %v204 = vlaneseq
    %v205 = vshrl.u32 %v204, 7
    %v206 = vsub.s32 2, %v205
    %v207 = vrot.slane %v194, %v206
    %v208 = vlaneseq
    %v209 = vshrl.u32 %v208, 7
    %v210 = vsub.s32 3, %v209
    %v211 = vrot.slane %v194, %v210
    %v344 = vunpack.c.l.b16 %v66
    %v345 = vunpack.c.h.b16 %v66
    %v346 = vunpack.c.l.b16 %v67
    %v347 = vunpack.c.h.b16 %v67
    %v348 = vunpack.c.l.b16 %v68
    %v349 = vunpack.c.h.b16 %v68
    %v350 = vunpack.c.l.b16 %v69
    %v351 = vunpack.c.h.b16 %v69
    %v352 = vunpack.c.l.b16 %v70
    %v353 = vunpack.c.h.b16 %v70
    %v354 = vunpack.c.l.b16 %v71
    %v355 = vunpack.c.h.b16 %v71
    %v356 = vunpack.c.l.b16 %v72
    %v357 = vunpack.c.h.b16 %v72
    %v358 = vunpack.c.l.b16 %v73
    %v359 = vunpack.c.h.b16 %v73
    %v360 = vunpack.c.l.b16 %v74
    %v361 = vunpack.c.h.b16 %v74
    %v362 = vunpack.c.l.b16 %v75
    %v363 = vunpack.c.h.b16 %v75
    %v364 = vunpack.c.l.b16 %v76
    %v365 = vunpack.c.h.b16 %v76
    %v366 = vunpack.c.l.b16 %v77
    %v367 = vunpack.c.h.b16 %v77
    %v368 = vunpack.c.l.b16 %v78
    %v369 = vunpack.c.h.b16 %v78
    %v370 = vunpack.c.l.b16 %v79
    %v371 = vunpack.c.h.b16 %v79
    %v372 = vunpack.c.l.b16 %v80
    %v373 = vunpack.c.h.b16 %v80
    %v374 = vunpack.c.l.b16 %v81
    %v375 = vunpack.c.h.b16 %v81
    %v376 = vunpack.c.l.b16 %v82
    %v377 = vunpack.c.h.b16 %v82
    %v378 = vunpack.c.l.b16 %v83
    %v379 = vunpack.c.h.b16 %v83
    %v380 = vunpack.c.l.b16 %v84
    %v381 = vunpack.c.h.b16 %v84
    %v382 = vunpack.c.l.b16 %v85
    %v383 = vunpack.c.h.b16 %v85
    %v384 = vunpack.c.l.b16 %v86
    %v385 = vunpack.c.h.b16 %v86
    %v386 = vunpack.c.l.b16 %v87
    %v387 = vunpack.c.h.b16 %v87
    %v388 = vunpack.c.l.b16 %v88
    %v389 = vunpack.c.h.b16 %v88
    %v390 = vunpack.c.l.b16 %v89
    %v391 = vunpack.c.h.b16 %v89
    %v392 = vunpack.c.l.b16 %v90
    %v393 = vunpack.c.h.b16 %v90
    %v394 = vunpack.c.l.b16 %v91
    %v395 = vunpack.c.h.b16 %v91
    %v396 = vunpack.c.l.b16 %v92
    %v397 = vunpack.c.h.b16 %v92
    %v398 = vunpack.c.l.b16 %v93
    %v399 = vunpack.c.h.b16 %v93
    %v400 = vunpack.c.l.b16 %v94
    %v401 = vunpack.c.h.b16 %v94
    %v402 = vunpack.c.l.b16 %v95
    %v403 = vunpack.c.h.b16 %v95
    %v404 = vunpack.c.l.b16 %v96
    %v405 = vunpack.c.h.b16 %v96
    %v406 = vunpack.c.l.b16 %v97
    %v407 = vunpack.c.h.b16 %v97
    %v408 = vunpack.c.l.b16 %v98
    %v409 = vunpack.c.h.b16 %v98
    %v410 = vunpack.c.l.b16 %v99
    %v411 = vunpack.c.h.b16 %v99
    %v412 = vunpack.c.l.b16 %v100
    %v413 = vunpack.c.h.b16 %v100
    %v414 = vunpack.c.l.b16 %v101
    %v415 = vunpack.c.h.b16 %v101
    %v416 = vunpack.c.l.b16 %v102
    %v417 = vunpack.c.h.b16 %v102
    %v418 = vunpack.c.l.b16 %v103
    %v419 = vunpack.c.h.b16 %v103
    %v420 = vunpack.c.l.b16 %v104
    %v421 = vunpack.c.h.b16 %v104
    %v422 = vunpack.c.l.b16 %v105
    %v423 = vunpack.c.h.b16 %v105
    %v424 = vunpack.c.l.b16 %v106
    %v425 = vunpack.c.h.b16 %v106
    %v426 = vunpack.c.l.b16 %v107
    %v427 = vunpack.c.h.b16 %v107
    %v428 = vunpack.c.l.b16 %v108
    %v429 = vunpack.c.h.b16 %v108
    %v430 = vunpack.c.l.b16 %v109
    %v431 = vunpack.c.h.b16 %v109
    %v432 = vunpack.c.l.b16 %v110
    %v433 = vunpack.c.h.b16 %v110
    %v434 = vunpack.c.l.b16 %v111
    %v435 = vunpack.c.h.b16 %v111
    %v436 = vunpack.c.l.b16 %v112
    %v437 = vunpack.c.h.b16 %v112
    %v438 = vunpack.c.l.b16 %v113
    %v439 = vunpack.c.h.b16 %v113
    %v440 = vunpack.c.l.b16 %v114
    %v441 = vunpack.c.h.b16 %v114
    %v442 = vunpack.c.l.b16 %v115
    %v443 = vunpack.c.h.b16 %v115
    %v444 = vunpack.c.l.b16 %v116
    %v445 = vunpack.c.h.b16 %v116
    %v446 = vunpack.c.l.b16 %v117
    %v447 = vunpack.c.h.b16 %v117
    %v448 = vunpack.c.l.b16 %v118
    %v449 = vunpack.c.h.b16 %v118
    %v450 = vunpack.c.l.b16 %v119
    %v451 = vunpack.c.h.b16 %v119
    %v452 = vunpack.c.l.b16 %v120
    %v453 = vunpack.c.h.b16 %v120
    %v454 = vunpack.c.l.b16 %v121
    %v455 = vunpack.c.h.b16 %v121
    %v456 = vunpack.c.l.b16 %v122
    %v457 = vunpack.c.h.b16 %v122
    %v458 = vunpack.c.l.b16 %v123
    %v459 = vunpack.c.h.b16 %v123
    %v460 = vunpack.c.l.b16 %v124
    %v461 = vunpack.c.h.b16 %v124
    %v462 = vunpack.c.l.b16 %v125
    %v463 = vunpack.c.h.b16 %v125
    %v464 = vunpack.c.l.b16 %v126
    %v465 = vunpack.c.h.b16 %v126
    %v466 = vunpack.c.l.b16 %v127
    %v467 = vunpack.c.h.b16 %v127
    %v468 = vunpack.c.l.b16 %v128
    %v469 = vunpack.c.h.b16 %v128
    %v470 = vunpack.c.l.b16 %v129
    %v471 = vunpack.c.h.b16 %v129
    %v472 = vunpack.c.l.b16 %v130
    %v473 = vunpack.c.h.b16 %v130
    %v474 = vunpack.c.l.b16 %v131
    %v475 = vunpack.c.h.b16 %v131
    %v476 = vunpack.c.l.b16 %v132
    %v477 = vunpack.c.h.b16 %v132
    %v478 = vunpack.c.l.b16 %v133
    %v479 = vunpack.c.h.b16 %v133
    %v480 = vunpack.c.l.b16 %v134
    %v481 = vunpack.c.h.b16 %v134
    %v482 = vunpack.c.l.b16 %v135
    %v483 = vunpack.c.h.b16 %v135
    %v484 = vunpack.c.l.b16 %v136
    %v485 = vunpack.c.h.b16 %v136
    %v486 = vunpack.c.l.b16 %v137
    %v487 = vunpack.c.h.b16 %v137
    %v488 = vunpack.c.l.b16 %v138
    %v489 = vunpack.c.h.b16 %v138
    %v490 = vunpack.c.l.b16 %v139
    %v491 = vunpack.c.h.b16 %v139
    %v492 = vunpack.c.l.b16 %v140
    %v493 = vunpack.c.h.b16 %v140
    %v494 = vunpack.c.l.b16 %v141
    %v495 = vunpack.c.h.b16 %v141
    %v496 = vunpack.c.l.b16 %v142
    %v497 = vunpack.c.h.b16 %v142
    %v498 = vunpack.c.l.b16 %v143
    %v499 = vunpack.c.h.b16 %v143
    %v500 = vunpack.c.l.b16 %v144
    %v501 = vunpack.c.h.b16 %v144
    %v502 = vunpack.c.l.b16 %v145
    %v503 = vunpack.c.h.b16 %v145
    %v504 = vunpack.c.l.b16 %v146
    %v505 = vunpack.c.h.b16 %v146
    %v506 = vunpack.c.l.b16 %v147
    %v507 = vunpack.c.h.b16 %v147
    %v508 = vunpack.c.l.b16 %v148
    %v509 = vunpack.c.h.b16 %v148
    %v510 = vunpack.c.l.b16 %v149
    %v511 = vunpack.c.h.b16 %v149
    %v512 = vunpack.c.l.b16 %v150
    %v513 = vunpack.c.h.b16 %v150
    %v514 = vunpack.c.l.b16 %v151
    %v515 = vunpack.c.h.b16 %v151
    %v516 = vunpack.c.l.b16 %v152
    %v517 = vunpack.c.h.b16 %v152
    %v518 = vunpack.c.l.b16 %v153
    %v519 = vunpack.c.h.b16 %v153
    %v520 = vunpack.c.l.b16 %v154
    %v521 = vunpack.c.h.b16 %v154
    %v522 = vunpack.c.l.b16 %v155
    %v523 = vunpack.c.h.b16 %v155
    %v524 = vunpack.c.l.b16 %v156
    %v525 = vunpack.c.h.b16 %v156
    %v526 = vunpack.c.l.b16 %v157
    %v527 = vunpack.c.h.b16 %v157
    %v528 = vunpack.c.l.b16 %v158
    %v529 = vunpack.c.h.b16 %v158
    %v530 = vunpack.c.l.b16 %v159
    %v531 = vunpack.c.h.b16 %v159
    %v532 = vunpack.c.l.b16 %v160
    %v533 = vunpack.c.h.b16 %v160
    %v534 = vunpack.c.l.b16 %v161
    %v535 = vunpack.c.h.b16 %v161
    %v536 = vunpack.c.l.b16 %v162
    %v537 = vunpack.c.h.b16 %v162
    %v538 = vunpack.c.l.b16 %v163
    %v539 = vunpack.c.h.b16 %v163
    %v540 = vunpack.c.l.b16 %v164
    %v541 = vunpack.c.h.b16 %v164
    %v542 = vunpack.c.l.b16 %v165
    %v543 = vunpack.c.h.b16 %v165
    %v544 = vunpack.c.l.b16 %v166
    %v545 = vunpack.c.h.b16 %v166
    %v546 = vunpack.c.l.b16 %v167
    %v547 = vunpack.c.h.b16 %v167
    %v548 = vunpack.c.l.b16 %v168
    %v549 = vunpack.c.h.b16 %v168
    %v550 = vunpack.c.l.b16 %v169
    %v551 = vunpack.c.h.b16 %v169
    %v552 = vunpack.c.l.b16 %v170
    %v553 = vunpack.c.h.b16 %v170
    %v554 = vunpack.c.l.b16 %v171
    %v555 = vunpack.c.h.b16 %v171
    %v556 = vunpack.c.l.b16 %v172
    %v557 = vunpack.c.h.b16 %v172
    %v558 = vunpack.c.l.b16 %v173
    %v559 = vunpack.c.h.b16 %v173
    %v560 = vunpack.c.l.b16 %v174
    %v561 = vunpack.c.h.b16 %v174
    %v562 = vunpack.c.l.b16 %v175
    %v563 = vunpack.c.h.b16 %v175
    %v564 = vunpack.c.l.b16 %v176
    %v565 = vunpack.c.h.b16 %v176
    %v566 = vunpack.c.l.b16 %v177
    %v567 = vunpack.c.h.b16 %v177
    %v568 = vunpack.c.l.b16 %v178
    %v569 = vunpack.c.h.b16 %v178
    %v570 = vunpack.c.l.b16 %v179
    %v571 = vunpack.c.h.b16 %v179
    %v572 = vunpack.c.l.b16 %v180
    %v573 = vunpack.c.h.b16 %v180
    %v574 = vunpack.c.l.b16 %v181
    %v575 = vunpack.c.h.b16 %v181
    %v576 = vunpack.c.l.b16 %v182
    %v577 = vunpack.c.h.b16 %v182
    %v578 = vunpack.c.l.b16 %v183
    %v579 = vunpack.c.h.b16 %v183
    %v580 = vunpack.c.l.b16 %v184
    %v581 = vunpack.c.h.b16 %v184
    %v582 = vunpack.c.l.b16 %v185
    %v583 = vunpack.c.h.b16 %v185
    %v584 = vunpack.c.l.b16 %v186
    %v585 = vunpack.c.h.b16 %v186
    %v586 = vunpack.c.l.b16 %v187
    %v587 = vunpack.c.h.b16 %v187
    %v588 = vunpack.c.l.b16 %v188
    %v589 = vunpack.c.h.b16 %v188
    %v590 = vunpack.c.l.b16 %v189
    %v591 = vunpack.c.h.b16 %v189
    %v592 = vunpack.c.l.b16 %v190
    %v593 = vunpack.c.h.b16 %v190
    %v594 = vunpack.c.l.b16 %v191
    %v595 = vunpack.c.h.b16 %v191
    %v596 = vunpack.c.l.b16 %v192
    %v597 = vunpack.c.h.b16 %v192
    %v598 = vunpack.c.l.b16 %v193
    %v599 = vunpack.c.h.b16 %v193
    %v600 = vpack.c.b16 %v348, %v344
    %v601 = vpack.c.b16 %v349, %v345
    %v602 = vpack.c.b16 %v350, %v346
    %v603 = vpack.c.b16 %v351, %v347
    %v604 = vpack.c.b16 %v356, %v352
    %v605 = vpack.c.b16 %v357, %v353
    %v606 = vpack.c.b16 %v358, %v354
    %v607 = vpack.c.b16 %v359, %v355
    %v608 = vpack.c.b16 %v364, %v360
    %v609 = vpack.c.b16 %v365, %v361
    %v610 = vpack.c.b16 %v366, %v362
    %v611 = vpack.c.b16 %v367, %v363
    %v612 = vpack.c.b16 %v372, %v368
    %v613 = vpack.c.b16 %v373, %v369
    %v614 = vpack.c.b16 %v374, %v370
    %v615 = vpack.c.b16 %v375, %v371
    %v616 = vpack.c.b16 %v380, %v376
    %v617 = vpack.c.b16 %v381, %v377
    %v618 = vpack.c.b16 %v382, %v378
    %v619 = vpack.c.b16 %v383, %v379
    %v620 = vpack.c.b16 %v388, %v384
    %v621 = vpack.c.b16 %v389, %v385
    %v622 = vpack.c.b16 %v390, %v386
    %v623 = vpack.c.b16 %v391, %v387
    %v624 = vpack.c.b16 %v396, %v392
    %v625 = vpack.c.b16 %v397, %v393
    %v626 = vpack.c.b16 %v398, %v394
    %v627 = vpack.c.b16 %v399, %v395
    %v628 = vpack.c.b16 %v404, %v400
    %v629 = vpack.c.b16 %v405, %v401
    %v630 = vpack.c.b16 %v406, %v402
    %v631 = vpack.c.b16 %v407, %v403
    %v632 = vpack.c.b16 %v412, %v408
    %v633 = vpack.c.b16 %v413, %v409
    %v634 = vpack.c.b16 %v414, %v410
    %v635 = vpack.c.b16 %v415, %v411
    %v636 = vpack.c.b16 %v420, %v416
    %v637 = vpack.c.b16 %v421, %v417
    %v638 = vpack.c.b16 %v422, %v418
    %v639 = vpack.c.b16 %v423, %v419
    %v640 = vpack.c.b16 %v428, %v424
    %v641 = vpack.c.b16 %v429, %v425
    %v642 = vpack.c.b16 %v430, %v426
    %v643 = vpack.c.b16 %v431, %v427
    %v644 = vpack.c.b16 %v436, %v432
    %v645 = vpack.c.b16 %v437, %v433
    %v646 = vpack.c.b16 %v438, %v434
    %v647 = vpack.c.b16 %v439, %v435
    %v648 = vpack.c.b16 %v444, %v440
    %v649 = vpack.c.b16 %v445, %v441
    %v650 = vpack.c.b16 %v446, %v442
    %v651 = vpack.c.b16 %v447, %v443
    %v652 = vpack.c.b16 %v452, %v448
    %v653 = vpack.c.b16 %v453, %v449
    %v654 = vpack.c.b16 %v454, %v450
    %v655 = vpack.c.b16 %v455, %v451
    %v656 = vpack.c.b16 %v460, %v456
    %v657 = vpack.c.b16 %v461, %v457
    %v658 = vpack.c.b16 %v462, %v458
    %v659 = vpack.c.b16 %v463, %v459
    %v660 = vpack.c.b16 %v468, %v464
    %v661 = vpack.c.b16 %v469, %v465
    %v662 = vpack.c.b16 %v470, %v466
    %v663 = vpack.c.b16 %v471, %v467
    %v664 = vpack.c.b16 %v476, %v472
    %v665 = vpack.c.b16 %v477, %v473
    %v666 = vpack.c.b16 %v478, %v474
    %v667 = vpack.c.b16 %v479, %v475
    %v668 = vpack.c.b16 %v484, %v480
    %v669 = vpack.c.b16 %v485, %v481
    %v670 = vpack.c.b16 %v486, %v482
    %v671 = vpack.c.b16 %v487, %v483
    %v672 = vpack.c.b16 %v492, %v488
    %v673 = vpack.c.b16 %v493, %v489
    %v674 = vpack.c.b16 %v494, %v490
    %v675 = vpack.c.b16 %v495, %v491
    %v676 = vpack.c.b16 %v500, %v496
    %v677 = vpack.c.b16 %v501, %v497
    %v678 = vpack.c.b16 %v502, %v498
    %v679 = vpack.c.b16 %v503, %v499
    %v680 = vpack.c.b16 %v508, %v504
    %v681 = vpack.c.b16 %v509, %v505
    %v682 = vpack.c.b16 %v510, %v506
    %v683 = vpack.c.b16 %v511, %v507
    %v684 = vpack.c.b16 %v516, %v512
    %v685 = vpack.c.b16 %v517, %v513
    %v686 = vpack.c.b16 %v518, %v514
    %v687 = vpack.c.b16 %v519, %v515
    %v688 = vpack.c.b16 %v524, %v520
    %v689 = vpack.c.b16 %v525, %v521
    %v690 = vpack.c.b16 %v526, %v522
    %v691 = vpack.c.b16 %v527, %v523
    %v692 = vpack.c.b16 %v532, %v528
    %v693 = vpack.c.b16 %v533, %v529
    %v694 = vpack.c.b16 %v534, %v530
    %v695 = vpack.c.b16 %v535, %v531
    %v696 = vpack.c.b16 %v540, %v536
    %v697 = vpack.c.b16 %v541, %v537
    %v698 = vpack.c.b16 %v542, %v538
    %v699 = vpack.c.b16 %v543, %v539
    %v700 = vpack.c.b16 %v548, %v544
    %v701 = vpack.c.b16 %v549, %v545
    %v702 = vpack.c.b16 %v550, %v546
    %v703 = vpack.c.b16 %v551, %v547
    %v704 = vpack.c.b16 %v556, %v552
    %v705 = vpack.c.b16 %v557, %v553
    %v706 = vpack.c.b16 %v558, %v554
    %v707 = vpack.c.b16 %v559, %v555
    %v708 = vpack.c.b16 %v564, %v560
    %v709 = vpack.c.b16 %v565, %v561
    %v710 = vpack.c.b16 %v566, %v562
    %v711 = vpack.c.b16 %v567, %v563
    %v712 = vpack.c.b16 %v572, %v568
    %v713 = vpack.c.b16 %v573, %v569
    %v714 = vpack.c.b16 %v574, %v570
    %v715 = vpack.c.b16 %v575, %v571
    %v716 = vpack.c.b16 %v580, %v576
    %v717 = vpack.c.b16 %v581, %v577
    %v718 = vpack.c.b16 %v582, %v578
    %v719 = vpack.c.b16 %v583, %v579
    %v720 = vpack.c.b16 %v588, %v584
    %v721 = vpack.c.b16 %v589, %v585
    %v722 = vpack.c.b16 %v590, %v586
    %v723 = vpack.c.b16 %v591, %v587
    %v724 = vpack.c.b16 %v596, %v592
    %v725 = vpack.c.b16 %v597, %v593
    %v726 = vpack.c.b16 %v598, %v594
    %v727 = vpack.c.b16 %v599, %v595
    %856 = vmatprep.subr.bf16.mxu0 %v601
    %857 = vmatpush1.bf16.msra.mxu0 %v600
    %858 = vmatprep.subr.bf16.mxu0 %v605
    %859 = vmatpush1.bf16.msra.mxu0 %v604
    %860 = vmatprep.subr.bf16.mxu0 %v609
    %861 = vmatpush1.bf16.msra.mxu0 %v608
    %862 = vmatprep.subr.bf16.mxu0 %v613
    %863 = vmatpush1.bf16.msra.mxu0 %v612
    %864 = vmatprep.subr.bf16.mxu0 %v617
    %865 = vmatpush1.bf16.msra.mxu0 %v616
    %866 = vmatprep.subr.bf16.mxu0 %v621
    %867 = vmatpush1.bf16.msra.mxu0 %v620
    %868 = vmatprep.subr.bf16.mxu0 %v625
    %869 = vmatpush1.bf16.msra.mxu0 %v624
    %870 = vmatprep.subr.bf16.mxu0 %v629
    %871 = vmatpush1.bf16.msra.mxu0 %v628
    %872 = vmatprep.subr.bf16.mxu0 %v633
    %873 = vmatpush1.bf16.msra.mxu0 %v632
    %874 = vmatprep.subr.bf16.mxu0 %v637
    %875 = vmatpush1.bf16.msra.mxu0 %v636
    %876 = vmatprep.subr.bf16.mxu0 %v641
    %877 = vmatpush1.bf16.msra.mxu0 %v640
    %878 = vmatprep.subr.bf16.mxu0 %v645
    %879 = vmatpush1.bf16.msra.mxu0 %v644
    %880 = vmatprep.subr.bf16.mxu0 %v649
    %881 = vmatpush1.bf16.msra.mxu0 %v648
    %882 = vmatprep.subr.bf16.mxu0 %v653
    %883 = vmatpush1.bf16.msra.mxu0 %v652
    %884 = vmatprep.subr.bf16.mxu0 %v657
    %885 = vmatpush1.bf16.msra.mxu0 %v656
    %886 = vmatprep.subr.bf16.mxu0 %v661
    %887 = vmatpush1.bf16.msra.mxu0 %v660
    %888 = vmatprep.mubr.bf16.mxu0 %v63
    %889 = vmatmul.mubr.bf16.gmra.mrb[0].mxu0 %v62
    %v890 = vpop.f32.mrb[0].mxu0
    %v891 = vadd.f32 %v199, %v890
    %v892 = vpop.f32.mrb[0].mxu0
    %v893 = vadd.f32 %v203, %v892
    %v894 = vpop.f32.mrb[0].mxu0
    %v895 = vadd.f32 %v199, %v894
    %v896 = vpop.f32.mrb[0].mxu0
    %v897 = vadd.f32 %v203, %v896
    %898 = vdwg.mxu0
    %899 = vmatprep.subr.bf16.mxu0 %v665
    %900 = vmatpush1.bf16.msra.mxu0 %v664
    %901 = vmatprep.subr.bf16.mxu0 %v669
    %902 = vmatpush1.bf16.msra.mxu0 %v668
    %903 = vmatprep.subr.bf16.mxu0 %v673
    %904 = vmatpush1.bf16.msra.mxu0 %v672
    %905 = vmatprep.subr.bf16.mxu0 %v677
    %906 = vmatpush1.bf16.msra.mxu0 %v676
    %907 = vmatprep.subr.bf16.mxu0 %v681
    %908 = vmatpush1.bf16.msra.mxu0 %v680
    %909 = vmatprep.subr.bf16.mxu0 %v685
    %910 = vmatpush1.bf16.msra.mxu0 %v684
    %911 = vmatprep.subr.bf16.mxu0 %v689
    %912 = vmatpush1.bf16.msra.mxu0 %v688
    %913 = vmatprep.subr.bf16.mxu0 %v693
    %914 = vmatpush1.bf16.msra.mxu0 %v692
    %915 = vmatprep.subr.bf16.mxu0 %v697
    %916 = vmatpush1.bf16.msra.mxu0 %v696
    %917 = vmatprep.subr.bf16.mxu0 %v701
    %918 = vmatpush1.bf16.msra.mxu0 %v700
    %919 = vmatprep.subr.bf16.mxu0 %v705
    %920 = vmatpush1.bf16.msra.mxu0 %v704
    %921 = vmatprep.subr.bf16.mxu0 %v709
    %922 = vmatpush1.bf16.msra.mxu0 %v708
    %923 = vmatprep.subr.bf16.mxu0 %v713
    %924 = vmatpush1.bf16.msra.mxu0 %v712
    %925 = vmatprep.subr.bf16.mxu0 %v717
    %926 = vmatpush1.bf16.msra.mxu0 %v716
    %927 = vmatprep.subr.bf16.mxu0 %v721
    %928 = vmatpush1.bf16.msra.mxu0 %v720
    %929 = vmatprep.subr.bf16.mxu0 %v725
    %930 = vmatpush1.bf16.msra.mxu0 %v724
    %931 = vmatprep.mubr.bf16.mxu0 %v65
    %932 = vmatmul.mubr.bf16.gmra.mrb[0].mxu0 %v64
    %v933 = vpop.f32.mrb[0].mxu0
    %v934 = vadd.f32 %v891, %v933
    %v935 = vpop.f32.mrb[0].mxu0
    %v936 = vadd.f32 %v893, %v935
    %v937 = vpop.f32.mrb[0].mxu0
    %v938 = vadd.f32 %v895, %v937
    %v939 = vpop.f32.mrb[0].mxu0
    %v940 = vadd.f32 %v897, %v939
    %941 = vdwg.mxu0
    %942 = vmatprep.subr.bf16.mxu0 %v603
    %943 = vmatpush1.bf16.msra.mxu0 %v602
    %944 = vmatprep.subr.bf16.mxu0 %v607
    %945 = vmatpush1.bf16.msra.mxu0 %v606
    %946 = vmatprep.subr.bf16.mxu0 %v611
    %947 = vmatpush1.bf16.msra.mxu0 %v610
    %948 = vmatprep.subr.bf16.mxu0 %v615
    %949 = vmatpush1.bf16.msra.mxu0 %v614
    %950 = vmatprep.subr.bf16.mxu0 %v619
    %951 = vmatpush1.bf16.msra.mxu0 %v618
    %952 = vmatprep.subr.bf16.mxu0 %v623
    %953 = vmatpush1.bf16.msra.mxu0 %v622
    %954 = vmatprep.subr.bf16.mxu0 %v627
    %955 = vmatpush1.bf16.msra.mxu0 %v626
    %956 = vmatprep.subr.bf16.mxu0 %v631
    %957 = vmatpush1.bf16.msra.mxu0 %v630
    %958 = vmatprep.subr.bf16.mxu0 %v635
    %959 = vmatpush1.bf16.msra.mxu0 %v634
    %960 = vmatprep.subr.bf16.mxu0 %v639
    %961 = vmatpush1.bf16.msra.mxu0 %v638
    %962 = vmatprep.subr.bf16.mxu0 %v643
    %963 = vmatpush1.bf16.msra.mxu0 %v642
    %964 = vmatprep.subr.bf16.mxu0 %v647
    %965 = vmatpush1.bf16.msra.mxu0 %v646
    %966 = vmatprep.subr.bf16.mxu0 %v651
    %967 = vmatpush1.bf16.msra.mxu0 %v650
    %968 = vmatprep.subr.bf16.mxu0 %v655
    %969 = vmatpush1.bf16.msra.mxu0 %v654
    %970 = vmatprep.subr.bf16.mxu0 %v659
    %971 = vmatpush1.bf16.msra.mxu0 %v658
    %972 = vmatprep.subr.bf16.mxu0 %v663
    %973 = vmatpush1.bf16.msra.mxu0 %v662
    %974 = vmatprep.mubr.bf16.mxu0 %v63
    %975 = vmatmul.mubr.bf16.gmra.mrb[0].mxu0 %v62
    %v976 = vpop.f32.mrb[0].mxu0
    %v977 = vadd.f32 %v207, %v976
    %v978 = vpop.f32.mrb[0].mxu0
    %v979 = vadd.f32 %v211, %v978
    %v980 = vpop.f32.mrb[0].mxu0
    %v981 = vadd.f32 %v207, %v980
    %v982 = vpop.f32.mrb[0].mxu0
    %v983 = vadd.f32 %v211, %v982
    %984 = vdwg.mxu0
    %985 = vmatprep.subr.bf16.mxu0 %v667
    %986 = vmatpush1.bf16.msra.mxu0 %v666
    %987 = vmatprep.subr.bf16.mxu0 %v671
    %988 = vmatpush1.bf16.msra.mxu0 %v670
    %989 = vmatprep.subr.bf16.mxu0 %v675
    %990 = vmatpush1.bf16.msra.mxu0 %v674
    %991 = vmatprep.subr.bf16.mxu0 %v679
    %992 = vmatpush1.bf16.msra.mxu0 %v678
    %993 = vmatprep.subr.bf16.mxu0 %v683
    %994 = vmatpush1.bf16.msra.mxu0 %v682
    %995 = vmatprep.subr.bf16.mxu0 %v687
    %996 = vmatpush1.bf16.msra.mxu0 %v686
    %997 = vmatprep.subr.bf16.mxu0 %v691
    %998 = vmatpush1.bf16.msra.mxu0 %v690
    %999 = vmatprep.subr.bf16.mxu0 %v695
    %1000 = vmatpush1.bf16.msra.mxu0 %v694
    %1001 = vmatprep.subr.bf16.mxu0 %v699
    %1002 = vmatpush1.bf16.msra.mxu0 %v698
    %1003 = vmatprep.subr.bf16.mxu0 %v703
    %1004 = vmatpush1.bf16.msra.mxu0 %v702
    %1005 = vmatprep.subr.bf16.mxu0 %v707
    %1006 = vmatpush1.bf16.msra.mxu0 %v706
    %1007 = vmatprep.subr.bf16.mxu0 %v711
    %1008 = vmatpush1.bf16.msra.mxu0 %v710
    %1009 = vmatprep.subr.bf16.mxu0 %v715
    %1010 = vmatpush1.bf16.msra.mxu0 %v714
    %1011 = vmatprep.subr.bf16.mxu0 %v719
    %1012 = vmatpush1.bf16.msra.mxu0 %v718
    %1013 = vmatprep.subr.bf16.mxu0 %v723
    %1014 = vmatpush1.bf16.msra.mxu0 %v722
    %1015 = vmatprep.subr.bf16.mxu0 %v727
    %1016 = vmatpush1.bf16.msra.mxu0 %v726
    %1017 = vmatprep.mubr.bf16.mxu0 %v65
    %1018 = vmatmul.mubr.bf16.gmra.mrb[0].mxu0 %v64
    %v1019 = vpop.f32.mrb[0].mxu0
    %v1020 = vadd.f32 %v977, %v1019
    %v1021 = vpop.f32.mrb[0].mxu0
    %v1022 = vadd.f32 %v979, %v1021
    %v1023 = vpop.f32.mrb[0].mxu0
    %v1024 = vadd.f32 %v981, %v1023
    %v1025 = vpop.f32.mrb[0].mxu0
    %v1026 = vadd.f32 %v983, %v1025
    %1027 = vdwg.mxu0
    %v1028 = vmax.f32 %v934, 0.0
    %v1029 = vmax.f32 %v936, 0.0
    %v1030 = vmax.f32 %v1020, 0.0
    %v1031 = vmax.f32 %v1022, 0.0
    %v1032 = vmax.f32 %v938, 0.0
    %v1033 = vmax.f32 %v940, 0.0
    %v1034 = vmax.f32 %v1024, 0.0
    %v1035 = vmax.f32 %v1026, 0.0
    %v1036 = vpack.c.bf16 %v1032, %v1028
    %v1037 = vpack.c.bf16 %v1033, %v1029
    %v1038 = vpack.c.bf16 %v1034, %v1030
    %v1039 = vpack.c.bf16 %v1035, %v1031
    %s1040 = scalar_lea.vmem [#allocation5], 1024
    %v1041 = vld [vmem:[%s1040] sm:$0xff]
    %v1042 = vld [vmem:[%s1040 + $0x8] sm:$0xff]
    %v1043 = vld [vmem:[%s1040 + $0x10] sm:$0xff]
    %v1044 = vld [vmem:[%s1040 + $0x18] sm:$0xff]
    %v1045 = vld [vmem:[%s1040 + $0x20] sm:$0xff]
    %v1046 = vld [vmem:[%s1040 + $0x28] sm:$0xff]
    %v1047 = vld [vmem:[%s1040 + $0x30] sm:$0xff]
    %v1048 = vld [vmem:[%s1040 + $0x38] sm:$0xff]
    %v1049 = vld [vmem:[%s1040 + $0x40] sm:$0xff]
    %v1050 = vld [vmem:[%s1040 + $0x48] sm:$0xff]
    %v1051 = vld [vmem:[%s1040 + $0x50] sm:$0xff]
    %v1052 = vld [vmem:[%s1040 + $0x58] sm:$0xff]
    %v1053 = vld [vmem:[%s1040 + $0x60] sm:$0xff]
    %v1054 = vld [vmem:[%s1040 + $0x68] sm:$0xff]
    %v1055 = vld [vmem:[%s1040 + $0x70] sm:$0xff]
    %v1056 = vld [vmem:[%s1040 + $0x78] sm:$0xff]
    %v1057 = vld [vmem:[%s1040 + $0x80] sm:$0xff]
    %v1058 = vld [vmem:[%s1040 + $0x88] sm:$0xff]
    %v1059 = vld [vmem:[%s1040 + $0x90] sm:$0xff]
    %v1060 = vld [vmem:[%s1040 + $0x98] sm:$0xff]
    %v1061 = vld [vmem:[%s1040 + $0xa0] sm:$0xff]
    %v1062 = vld [vmem:[%s1040 + $0xa8] sm:$0xff]
    %v1063 = vld [vmem:[%s1040 + $0xb0] sm:$0xff]
    %v1064 = vld [vmem:[%s1040 + $0xb8] sm:$0xff]
    %v1065 = vld [vmem:[%s1040 + $0xc0] sm:$0xff]
    %v1066 = vld [vmem:[%s1040 + $0xc8] sm:$0xff]
    %v1067 = vld [vmem:[%s1040 + $0xd0] sm:$0xff]
    %v1068 = vld [vmem:[%s1040 + $0xd8] sm:$0xff]
    %v1069 = vld [vmem:[%s1040 + $0xe0] sm:$0xff]
    %v1070 = vld [vmem:[%s1040 + $0xe8] sm:$0xff]
    %v1071 = vld [vmem:[%s1040 + $0xf0] sm:$0xff]
    %v1072 = vld [vmem:[%s1040 + $0xf8] sm:$0xff]
    %v1073 = vld [vmem:[%s1040 + $0x100] sm:$0xff]
    %v1074 = vld [vmem:[%s1040 + $0x108] sm:$0xff]
    %v1075 = vld [vmem:[%s1040 + $0x110] sm:$0xff]
    %v1076 = vld [vmem:[%s1040 + $0x118] sm:$0xff]
    %v1077 = vld [vmem:[%s1040 + $0x120] sm:$0xff]
    %v1078 = vld [vmem:[%s1040 + $0x128] sm:$0xff]
    %v1079 = vld [vmem:[%s1040 + $0x130] sm:$0xff]
    %v1080 = vld [vmem:[%s1040 + $0x138] sm:$0xff]
    %v1081 = vld [vmem:[%s1040 + $0x140] sm:$0xff]
    %v1082 = vld [vmem:[%s1040 + $0x148] sm:$0xff]
    %v1083 = vld [vmem:[%s1040 + $0x150] sm:$0xff]
    %v1084 = vld [vmem:[%s1040 + $0x158] sm:$0xff]
    %v1085 = vld [vmem:[%s1040 + $0x160] sm:$0xff]
    %v1086 = vld [vmem:[%s1040 + $0x168] sm:$0xff]
    %v1087 = vld [vmem:[%s1040 + $0x170] sm:$0xff]
    %v1088 = vld [vmem:[%s1040 + $0x178] sm:$0xff]
    %v1089 = vld [vmem:[%s1040 + $0x180] sm:$0xff]
    %v1090 = vld [vmem:[%s1040 + $0x188] sm:$0xff]
    %v1091 = vld [vmem:[%s1040 + $0x190] sm:$0xff]
    %v1092 = vld [vmem:[%s1040 + $0x198] sm:$0xff]
    %v1093 = vld [vmem:[%s1040 + $0x1a0] sm:$0xff]
    %v1094 = vld [vmem:[%s1040 + $0x1a8] sm:$0xff]
    %v1095 = vld [vmem:[%s1040 + $0x1b0] sm:$0xff]
    %v1096 = vld [vmem:[%s1040 + $0x1b8] sm:$0xff]
    %v1097 = vld [vmem:[%s1040 + $0x1c0] sm:$0xff]
    %v1098 = vld [vmem:[%s1040 + $0x1c8] sm:$0xff]
    %v1099 = vld [vmem:[%s1040 + $0x1d0] sm:$0xff]
    %v1100 = vld [vmem:[%s1040 + $0x1d8] sm:$0xff]
    %v1101 = vld [vmem:[%s1040 + $0x1e0] sm:$0xff]
    %v1102 = vld [vmem:[%s1040 + $0x1e8] sm:$0xff]
    %v1103 = vld [vmem:[%s1040 + $0x1f0] sm:$0xff]
    %v1104 = vld [vmem:[%s1040 + $0x1f8] sm:$0xff]
    %v1105 = vld [vmem:[%s1040 + $0x200] sm:$0xff]
    %v1106 = vld [vmem:[%s1040 + $0x208] sm:$0xff]
    %v1107 = vld [vmem:[%s1040 + $0x210] sm:$0xff]
    %v1108 = vld [vmem:[%s1040 + $0x218] sm:$0xff]
    %v1109 = vld [vmem:[%s1040 + $0x220] sm:$0xff]
    %v1110 = vld [vmem:[%s1040 + $0x228] sm:$0xff]
    %v1111 = vld [vmem:[%s1040 + $0x230] sm:$0xff]
    %v1112 = vld [vmem:[%s1040 + $0x238] sm:$0xff]
    %v1113 = vld [vmem:[%s1040 + $0x240] sm:$0xff]
    %v1114 = vld [vmem:[%s1040 + $0x248] sm:$0xff]
    %v1115 = vld [vmem:[%s1040 + $0x250] sm:$0xff]
    %v1116 = vld [vmem:[%s1040 + $0x258] sm:$0xff]
    %v1117 = vld [vmem:[%s1040 + $0x260] sm:$0xff]
    %v1118 = vld [vmem:[%s1040 + $0x268] sm:$0xff]
    %v1119 = vld [vmem:[%s1040 + $0x270] sm:$0xff]
    %v1120 = vld [vmem:[%s1040 + $0x278] sm:$0xff]
    %v1121 = vld [vmem:[%s1040 + $0x280] sm:$0xff]
    %v1122 = vld [vmem:[%s1040 + $0x288] sm:$0xff]
    %v1123 = vld [vmem:[%s1040 + $0x290] sm:$0xff]
    %v1124 = vld [vmem:[%s1040 + $0x298] sm:$0xff]
    %v1125 = vld [vmem:[%s1040 + $0x2a0] sm:$0xff]
    %v1126 = vld [vmem:[%s1040 + $0x2a8] sm:$0xff]
    %v1127 = vld [vmem:[%s1040 + $0x2b0] sm:$0xff]
    %v1128 = vld [vmem:[%s1040 + $0x2b8] sm:$0xff]
    %v1129 = vld [vmem:[%s1040 + $0x2c0] sm:$0xff]
    %v1130 = vld [vmem:[%s1040 + $0x2c8] sm:$0xff]
    %v1131 = vld [vmem:[%s1040 + $0x2d0] sm:$0xff]
    %v1132 = vld [vmem:[%s1040 + $0x2d8] sm:$0xff]
    %v1133 = vld [vmem:[%s1040 + $0x2e0] sm:$0xff]
    %v1134 = vld [vmem:[%s1040 + $0x2e8] sm:$0xff]
    %v1135 = vld [vmem:[%s1040 + $0x2f0] sm:$0xff]
    %v1136 = vld [vmem:[%s1040 + $0x2f8] sm:$0xff]
    %v1137 = vld [vmem:[%s1040 + $0x300] sm:$0xff]
    %v1138 = vld [vmem:[%s1040 + $0x308] sm:$0xff]
    %v1139 = vld [vmem:[%s1040 + $0x310] sm:$0xff]
    %v1140 = vld [vmem:[%s1040 + $0x318] sm:$0xff]
    %v1141 = vld [vmem:[%s1040 + $0x320] sm:$0xff]
    %v1142 = vld [vmem:[%s1040 + $0x328] sm:$0xff]
    %v1143 = vld [vmem:[%s1040 + $0x330] sm:$0xff]
    %v1144 = vld [vmem:[%s1040 + $0x338] sm:$0xff]
    %v1145 = vld [vmem:[%s1040 + $0x340] sm:$0xff]
    %v1146 = vld [vmem:[%s1040 + $0x348] sm:$0xff]
    %v1147 = vld [vmem:[%s1040 + $0x350] sm:$0xff]
    %v1148 = vld [vmem:[%s1040 + $0x358] sm:$0xff]
    %v1149 = vld [vmem:[%s1040 + $0x360] sm:$0xff]
    %v1150 = vld [vmem:[%s1040 + $0x368] sm:$0xff]
    %v1151 = vld [vmem:[%s1040 + $0x370] sm:$0xff]
    %v1152 = vld [vmem:[%s1040 + $0x378] sm:$0xff]
    %v1153 = vld [vmem:[%s1040 + $0x380] sm:$0xff]
    %v1154 = vld [vmem:[%s1040 + $0x388] sm:$0xff]
    %v1155 = vld [vmem:[%s1040 + $0x390] sm:$0xff]
    %v1156 = vld [vmem:[%s1040 + $0x398] sm:$0xff]
    %v1157 = vld [vmem:[%s1040 + $0x3a0] sm:$0xff]
    %v1158 = vld [vmem:[%s1040 + $0x3a8] sm:$0xff]
    %v1159 = vld [vmem:[%s1040 + $0x3b0] sm:$0xff]
    %v1160 = vld [vmem:[%s1040 + $0x3b8] sm:$0xff]
    %v1161 = vld [vmem:[%s1040 + $0x3c0] sm:$0xff]
    %v1162 = vld [vmem:[%s1040 + $0x3c8] sm:$0xff]
    %v1163 = vld [vmem:[%s1040 + $0x3d0] sm:$0xff]
    %v1164 = vld [vmem:[%s1040 + $0x3d8] sm:$0xff]
    %v1165 = vld [vmem:[%s1040 + $0x3e0] sm:$0xff]
    %v1166 = vld [vmem:[%s1040 + $0x3e8] sm:$0xff]
    %v1167 = vld [vmem:[%s1040 + $0x3f0] sm:$0xff]
    %v1168 = vld [vmem:[%s1040 + $0x3f8] sm:$0xff]
    %s1169 = scalar_lea.vmem [#allocation7], 1
    %v1170 = vld [vmem:[%s1169] ss:$4 sm:$0xf]
    %v1172 = vlaneseq
    %v1173 = vshrl.u32 %v1172, 7
    %v1174 = vsub.s32 0, %v1173
    %v1175 = vrot.slane %v1170, %v1174
    %v1176 = vlaneseq
    %v1177 = vshrl.u32 %v1176, 7
    %v1178 = vsub.s32 1, %v1177
    %v1179 = vrot.slane %v1170, %v1178
    %v1180 = vlaneseq
    %v1181 = vshrl.u32 %v1180, 7
    %v1182 = vsub.s32 2, %v1181
    %v1183 = vrot.slane %v1170, %v1182
    %v1184 = vlaneseq
    %v1185 = vshrl.u32 %v1184, 7
    %v1186 = vsub.s32 3, %v1185
    %v1187 = vrot.slane %v1170, %v1186
    %v1320 = vunpack.c.l.b16 %v1041
    %v1321 = vunpack.c.h.b16 %v1041
    %v1322 = vunpack.c.l.b16 %v1042
    %v1323 = vunpack.c.h.b16 %v1042
    %v1324 = vunpack.c.l.b16 %v1043
    %v1325 = vunpack.c.h.b16 %v1043
    %v1326 = vunpack.c.l.b16 %v1044
    %v1327 = vunpack.c.h.b16 %v1044
    %v1328 = vunpack.c.l.b16 %v1045
    %v1329 = vunpack.c.h.b16 %v1045
    %v1330 = vunpack.c.l.b16 %v1046
    %v1331 = vunpack.c.h.b16 %v1046
    %v1332 = vunpack.c.l.b16 %v1047
    %v1333 = vunpack.c.h.b16 %v1047
    %v1334 = vunpack.c.l.b16 %v1048
    %v1335 = vunpack.c.h.b16 %v1048
    %v1336 = vunpack.c.l.b16 %v1049
    %v1337 = vunpack.c.h.b16 %v1049
    %v1338 = vunpack.c.l.b16 %v1050
    %v1339 = vunpack.c.h.b16 %v1050
    %v1340 = vunpack.c.l.b16 %v1051
    %v1341 = vunpack.c.h.b16 %v1051
    %v1342 = vunpack.c.l.b16 %v1052
    %v1343 = vunpack.c.h.b16 %v1052
    %v1344 = vunpack.c.l.b16 %v1053
    %v1345 = vunpack.c.h.b16 %v1053
    %v1346 = vunpack.c.l.b16 %v1054
    %v1347 = vunpack.c.h.b16 %v1054
    %v1348 = vunpack.c.l.b16 %v1055
    %v1349 = vunpack.c.h.b16 %v1055
    %v1350 = vunpack.c.l.b16 %v1056
    %v1351 = vunpack.c.h.b16 %v1056
    %v1352 = vunpack.c.l.b16 %v1057
    %v1353 = vunpack.c.h.b16 %v1057
    %v1354 = vunpack.c.l.b16 %v1058
    %v1355 = vunpack.c.h.b16 %v1058
    %v1356 = vunpack.c.l.b16 %v1059
    %v1357 = vunpack.c.h.b16 %v1059
    %v1358 = vunpack.c.l.b16 %v1060
    %v1359 = vunpack.c.h.b16 %v1060
    %v1360 = vunpack.c.l.b16 %v1061
    %v1361 = vunpack.c.h.b16 %v1061
    %v1362 = vunpack.c.l.b16 %v1062
    %v1363 = vunpack.c.h.b16 %v1062
    %v1364 = vunpack.c.l.b16 %v1063
    %v1365 = vunpack.c.h.b16 %v1063
    %v1366 = vunpack.c.l.b16 %v1064
    %v1367 = vunpack.c.h.b16 %v1064
    %v1368 = vunpack.c.l.b16 %v1065
    %v1369 = vunpack.c.h.b16 %v1065
    %v1370 = vunpack.c.l.b16 %v1066
    %v1371 = vunpack.c.h.b16 %v1066
    %v1372 = vunpack.c.l.b16 %v1067
    %v1373 = vunpack.c.h.b16 %v1067
    %v1374 = vunpack.c.l.b16 %v1068
    %v1375 = vunpack.c.h.b16 %v1068
    %v1376 = vunpack.c.l.b16 %v1069
    %v1377 = vunpack.c.h.b16 %v1069
    %v1378 = vunpack.c.l.b16 %v1070
    %v1379 = vunpack.c.h.b16 %v1070
    %v1380 = vunpack.c.l.b16 %v1071
    %v1381 = vunpack.c.h.b16 %v1071
    %v1382 = vunpack.c.l.b16 %v1072
    %v1383 = vunpack.c.h.b16 %v1072
    %v1384 = vunpack.c.l.b16 %v1073
    %v1385 = vunpack.c.h.b16 %v1073
    %v1386 = vunpack.c.l.b16 %v1074
    %v1387 = vunpack.c.h.b16 %v1074
    %v1388 = vunpack.c.l.b16 %v1075
    %v1389 = vunpack.c.h.b16 %v1075
    %v1390 = vunpack.c.l.b16 %v1076
    %v1391 = vunpack.c.h.b16 %v1076
    %v1392 = vunpack.c.l.b16 %v1077
    %v1393 = vunpack.c.h.b16 %v1077
    %v1394 = vunpack.c.l.b16 %v1078
    %v1395 = vunpack.c.h.b16 %v1078
    %v1396 = vunpack.c.l.b16 %v1079
    %v1397 = vunpack.c.h.b16 %v1079
    %v1398 = vunpack.c.l.b16 %v1080
    %v1399 = vunpack.c.h.b16 %v1080
    %v1400 = vunpack.c.l.b16 %v1081
    %v1401 = vunpack.c.h.b16 %v1081
    %v1402 = vunpack.c.l.b16 %v1082
    %v1403 = vunpack.c.h.b16 %v1082
    %v1404 = vunpack.c.l.b16 %v1083
    %v1405 = vunpack.c.h.b16 %v1083
    %v1406 = vunpack.c.l.b16 %v1084
    %v1407 = vunpack.c.h.b16 %v1084
    %v1408 = vunpack.c.l.b16 %v1085
    %v1409 = vunpack.c.h.b16 %v1085
    %v1410 = vunpack.c.l.b16 %v1086
    %v1411 = vunpack.c.h.b16 %v1086
    %v1412 = vunpack.c.l.b16 %v1087
    %v1413 = vunpack.c.h.b16 %v1087
    %v1414 = vunpack.c.l.b16 %v1088
    %v1415 = vunpack.c.h.b16 %v1088
    %v1416 = vunpack.c.l.b16 %v1089
    %v1417 = vunpack.c.h.b16 %v1089
    %v1418 = vunpack.c.l.b16 %v1090
    %v1419 = vunpack.c.h.b16 %v1090
    %v1420 = vunpack.c.l.b16 %v1091
    %v1421 = vunpack.c.h.b16 %v1091
    %v1422 = vunpack.c.l.b16 %v1092
    %v1423 = vunpack.c.h.b16 %v1092
    %v1424 = vunpack.c.l.b16 %v1093
    %v1425 = vunpack.c.h.b16 %v1093
    %v1426 = vunpack.c.l.b16 %v1094
    %v1427 = vunpack.c.h.b16 %v1094
    %v1428 = vunpack.c.l.b16 %v1095
    %v1429 = vunpack.c.h.b16 %v1095
    %v1430 = vunpack.c.l.b16 %v1096
    %v1431 = vunpack.c.h.b16 %v1096
    %v1432 = vunpack.c.l.b16 %v1097
    %v1433 = vunpack.c.h.b16 %v1097
    %v1434 = vunpack.c.l.b16 %v1098
    %v1435 = vunpack.c.h.b16 %v1098
    %v1436 = vunpack.c.l.b16 %v1099
    %v1437 = vunpack.c.h.b16 %v1099
    %v1438 = vunpack.c.l.b16 %v1100
    %v1439 = vunpack.c.h.b16 %v1100
    %v1440 = vunpack.c.l.b16 %v1101
    %v1441 = vunpack.c.h.b16 %v1101
    %v1442 = vunpack.c.l.b16 %v1102
    %v1443 = vunpack.c.h.b16 %v1102
    %v1444 = vunpack.c.l.b16 %v1103
    %v1445 = vunpack.c.h.b16 %v1103
    %v1446 = vunpack.c.l.b16 %v1104
    %v1447 = vunpack.c.h.b16 %v1104
    %v1448 = vunpack.c.l.b16 %v1105
    %v1449 = vunpack.c.h.b16 %v1105
    %v1450 = vunpack.c.l.b16 %v1106
    %v1451 = vunpack.c.h.b16 %v1106
    %v1452 = vunpack.c.l.b16 %v1107
    %v1453 = vunpack.c.h.b16 %v1107
    %v1454 = vunpack.c.l.b16 %v1108
    %v1455 = vunpack.c.h.b16 %v1108
    %v1456 = vunpack.c.l.b16 %v1109
    %v1457 = vunpack.c.h.b16 %v1109
    %v1458 = vunpack.c.l.b16 %v1110
    %v1459 = vunpack.c.h.b16 %v1110
    %v1460 = vunpack.c.l.b16 %v1111
    %v1461 = vunpack.c.h.b16 %v1111
    %v1462 = vunpack.c.l.b16 %v1112
    %v1463 = vunpack.c.h.b16 %v1112
    %v1464 = vunpack.c.l.b16 %v1113
    %v1465 = vunpack.c.h.b16 %v1113
    %v1466 = vunpack.c.l.b16 %v1114
    %v1467 = vunpack.c.h.b16 %v1114
    %v1468 = vunpack.c.l.b16 %v1115
    %v1469 = vunpack.c.h.b16 %v1115
    %v1470 = vunpack.c.l.b16 %v1116
    %v1471 = vunpack.c.h.b16 %v1116
    %v1472 = vunpack.c.l.b16 %v1117
    %v1473 = vunpack.c.h.b16 %v1117
    %v1474 = vunpack.c.l.b16 %v1118
    %v1475 = vunpack.c.h.b16 %v1118
    %v1476 = vunpack.c.l.b16 %v1119
    %v1477 = vunpack.c.h.b16 %v1119
    %v1478 = vunpack.c.l.b16 %v1120
    %v1479 = vunpack.c.h.b16 %v1120
    %v1480 = vunpack.c.l.b16 %v1121
    %v1481 = vunpack.c.h.b16 %v1121
    %v1482 = vunpack.c.l.b16 %v1122
    %v1483 = vunpack.c.h.b16 %v1122
    %v1484 = vunpack.c.l.b16 %v1123
    %v1485 = vunpack.c.h.b16 %v1123
    %v1486 = vunpack.c.l.b16 %v1124
    %v1487 = vunpack.c.h.b16 %v1124
    %v1488 = vunpack.c.l.b16 %v1125
    %v1489 = vunpack.c.h.b16 %v1125
    %v1490 = vunpack.c.l.b16 %v1126
    %v1491 = vunpack.c.h.b16 %v1126
    %v1492 = vunpack.c.l.b16 %v1127
    %v1493 = vunpack.c.h.b16 %v1127
    %v1494 = vunpack.c.l.b16 %v1128
    %v1495 = vunpack.c.h.b16 %v1128
    %v1496 = vunpack.c.l.b16 %v1129
    %v1497 = vunpack.c.h.b16 %v1129
    %v1498 = vunpack.c.l.b16 %v1130
    %v1499 = vunpack.c.h.b16 %v1130
    %v1500 = vunpack.c.l.b16 %v1131
    %v1501 = vunpack.c.h.b16 %v1131
    %v1502 = vunpack.c.l.b16 %v1132
    %v1503 = vunpack.c.h.b16 %v1132
    %v1504 = vunpack.c.l.b16 %v1133
    %v1505 = vunpack.c.h.b16 %v1133
    %v1506 = vunpack.c.l.b16 %v1134
    %v1507 = vunpack.c.h.b16 %v1134
    %v1508 = vunpack.c.l.b16 %v1135
    %v1509 = vunpack.c.h.b16 %v1135
    %v1510 = vunpack.c.l.b16 %v1136
    %v1511 = vunpack.c.h.b16 %v1136
    %v1512 = vunpack.c.l.b16 %v1137
    %v1513 = vunpack.c.h.b16 %v1137
    %v1514 = vunpack.c.l.b16 %v1138
    %v1515 = vunpack.c.h.b16 %v1138
    %v1516 = vunpack.c.l.b16 %v1139
    %v1517 = vunpack.c.h.b16 %v1139
    %v1518 = vunpack.c.l.b16 %v1140
    %v1519 = vunpack.c.h.b16 %v1140
    %v1520 = vunpack.c.l.b16 %v1141
    %v1521 = vunpack.c.h.b16 %v1141
    %v1522 = vunpack.c.l.b16 %v1142
    %v1523 = vunpack.c.h.b16 %v1142
    %v1524 = vunpack.c.l.b16 %v1143
    %v1525 = vunpack.c.h.b16 %v1143
    %v1526 = vunpack.c.l.b16 %v1144
    %v1527 = vunpack.c.h.b16 %v1144
    %v1528 = vunpack.c.l.b16 %v1145
    %v1529 = vunpack.c.h.b16 %v1145
    %v1530 = vunpack.c.l.b16 %v1146
    %v1531 = vunpack.c.h.b16 %v1146
    %v1532 = vunpack.c.l.b16 %v1147
    %v1533 = vunpack.c.h.b16 %v1147
    %v1534 = vunpack.c.l.b16 %v1148
    %v1535 = vunpack.c.h.b16 %v1148
    %v1536 = vunpack.c.l.b16 %v1149
    %v1537 = vunpack.c.h.b16 %v1149
    %v1538 = vunpack.c.l.b16 %v1150
    %v1539 = vunpack.c.h.b16 %v1150
    %v1540 = vunpack.c.l.b16 %v1151
    %v1541 = vunpack.c.h.b16 %v1151
    %v1542 = vunpack.c.l.b16 %v1152
    %v1543 = vunpack.c.h.b16 %v1152
    %v1544 = vunpack.c.l.b16 %v1153
    %v1545 = vunpack.c.h.b16 %v1153
    %v1546 = vunpack.c.l.b16 %v1154
    %v1547 = vunpack.c.h.b16 %v1154
    %v1548 = vunpack.c.l.b16 %v1155
    %v1549 = vunpack.c.h.b16 %v1155
    %v1550 = vunpack.c.l.b16 %v1156
    %v1551 = vunpack.c.h.b16 %v1156
    %v1552 = vunpack.c.l.b16 %v1157
    %v1553 = vunpack.c.h.b16 %v1157
    %v1554 = vunpack.c.l.b16 %v1158
    %v1555 = vunpack.c.h.b16 %v1158
    %v1556 = vunpack.c.l.b16 %v1159
    %v1557 = vunpack.c.h.b16 %v1159
    %v1558 = vunpack.c.l.b16 %v1160
    %v1559 = vunpack.c.h.b16 %v1160
    %v1560 = vunpack.c.l.b16 %v1161
    %v1561 = vunpack.c.h.b16 %v1161
    %v1562 = vunpack.c.l.b16 %v1162
    %v1563 = vunpack.c.h.b16 %v1162
    %v1564 = vunpack.c.l.b16 %v1163
    %v1565 = vunpack.c.h.b16 %v1163
    %v1566 = vunpack.c.l.b16 %v1164
    %v1567 = vunpack.c.h.b16 %v1164
    %v1568 = vunpack.c.l.b16 %v1165
    %v1569 = vunpack.c.h.b16 %v1165
    %v1570 = vunpack.c.l.b16 %v1166
    %v1571 = vunpack.c.h.b16 %v1166
    %v1572 = vunpack.c.l.b16 %v1167
    %v1573 = vunpack.c.h.b16 %v1167
    %v1574 = vunpack.c.l.b16 %v1168
    %v1575 = vunpack.c.h.b16 %v1168
    %v1576 = vpack.c.b16 %v1324, %v1320
    %v1577 = vpack.c.b16 %v1325, %v1321
    %v1578 = vpack.c.b16 %v1326, %v1322
    %v1579 = vpack.c.b16 %v1327, %v1323
    %v1580 = vpack.c.b16 %v1332, %v1328
    %v1581 = vpack.c.b16 %v1333, %v1329
    %v1582 = vpack.c.b16 %v1334, %v1330
    %v1583 = vpack.c.b16 %v1335, %v1331
    %v1584 = vpack.c.b16 %v1340, %v1336
    %v1585 = vpack.c.b16 %v1341, %v1337
    %v1586 = vpack.c.b16 %v1342, %v1338
    %v1587 = vpack.c.b16 %v1343, %v1339
    %v1588 = vpack.c.b16 %v1348, %v1344
    %v1589 = vpack.c.b16 %v1349, %v1345
    %v1590 = vpack.c.b16 %v1350, %v1346
    %v1591 = vpack.c.b16 %v1351, %v1347
    %v1592 = vpack.c.b16 %v1356, %v1352
    %v1593 = vpack.c.b16 %v1357, %v1353
    %v1594 = vpack.c.b16 %v1358, %v1354
    %v1595 = vpack.c.b16 %v1359, %v1355
    %v1596 = vpack.c.b16 %v1364, %v1360
    %v1597 = vpack.c.b16 %v1365, %v1361
    %v1598 = vpack.c.b16 %v1366, %v1362
    %v1599 = vpack.c.b16 %v1367, %v1363
    %v1600 = vpack.c.b16 %v1372, %v1368
    %v1601 = vpack.c.b16 %v1373, %v1369
    %v1602 = vpack.c.b16 %v1374, %v1370
    %v1603 = vpack.c.b16 %v1375, %v1371
    %v1604 = vpack.c.b16 %v1380, %v1376
    %v1605 = vpack.c.b16 %v1381, %v1377
    %v1606 = vpack.c.b16 %v1382, %v1378
    %v1607 = vpack.c.b16 %v1383, %v1379
    %v1608 = vpack.c.b16 %v1388, %v1384
    %v1609 = vpack.c.b16 %v1389, %v1385
    %v1610 = vpack.c.b16 %v1390, %v1386
    %v1611 = vpack.c.b16 %v1391, %v1387
    %v1612 = vpack.c.b16 %v1396, %v1392
    %v1613 = vpack.c.b16 %v1397, %v1393
    %v1614 = vpack.c.b16 %v1398, %v1394
    %v1615 = vpack.c.b16 %v1399, %v1395
    %v1616 = vpack.c.b16 %v1404, %v1400
    %v1617 = vpack.c.b16 %v1405, %v1401
    %v1618 = vpack.c.b16 %v1406, %v1402
    %v1619 = vpack.c.b16 %v1407, %v1403
    %v1620 = vpack.c.b16 %v1412, %v1408
    %v1621 = vpack.c.b16 %v1413, %v1409
    %v1622 = vpack.c.b16 %v1414, %v1410
    %v1623 = vpack.c.b16 %v1415, %v1411
    %v1624 = vpack.c.b16 %v1420, %v1416
    %v1625 = vpack.c.b16 %v1421, %v1417
    %v1626 = vpack.c.b16 %v1422, %v1418
    %v1627 = vpack.c.b16 %v1423, %v1419
    %v1628 = vpack.c.b16 %v1428, %v1424
    %v1629 = vpack.c.b16 %v1429, %v1425
    %v1630 = vpack.c.b16 %v1430, %v1426
    %v1631 = vpack.c.b16 %v1431, %v1427
    %v1632 = vpack.c.b16 %v1436, %v1432
    %v1633 = vpack.c.b16 %v1437, %v1433
    %v1634 = vpack.c.b16 %v1438, %v1434
    %v1635 = vpack.c.b16 %v1439, %v1435
    %v1636 = vpack.c.b16 %v1444, %v1440
    %v1637 = vpack.c.b16 %v1445, %v1441
    %v1638 = vpack.c.b16 %v1446, %v1442
    %v1639 = vpack.c.b16 %v1447, %v1443
    %v1640 = vpack.c.b16 %v1452, %v1448
    %v1641 = vpack.c.b16 %v1453, %v1449
    %v1642 = vpack.c.b16 %v1454, %v1450
    %v1643 = vpack.c.b16 %v1455, %v1451
    %v1644 = vpack.c.b16 %v1460, %v1456
    %v1645 = vpack.c.b16 %v1461, %v1457
    %v1646 = vpack.c.b16 %v1462, %v1458
    %v1647 = vpack.c.b16 %v1463, %v1459
    %v1648 = vpack.c.b16 %v1468, %v1464
    %v1649 = vpack.c.b16 %v1469, %v1465
    %v1650 = vpack.c.b16 %v1470, %v1466
    %v1651 = vpack.c.b16 %v1471, %v1467
    %v1652 = vpack.c.b16 %v1476, %v1472
    %v1653 = vpack.c.b16 %v1477, %v1473
    %v1654 = vpack.c.b16 %v1478, %v1474
    %v1655 = vpack.c.b16 %v1479, %v1475
    %v1656 = vpack.c.b16 %v1484, %v1480
    %v1657 = vpack.c.b16 %v1485, %v1481
    %v1658 = vpack.c.b16 %v1486, %v1482
    %v1659 = vpack.c.b16 %v1487, %v1483
    %v1660 = vpack.c.b16 %v1492, %v1488
    %v1661 = vpack.c.b16 %v1493, %v1489
    %v1662 = vpack.c.b16 %v1494, %v1490
    %v1663 = vpack.c.b16 %v1495, %v1491
    %v1664 = vpack.c.b16 %v1500, %v1496
    %v1665 = vpack.c.b16 %v1501, %v1497
    %v1666 = vpack.c.b16 %v1502, %v1498
    %v1667 = vpack.c.b16 %v1503, %v1499
    %v1668 = vpack.c.b16 %v1508, %v1504
    %v1669 = vpack.c.b16 %v1509, %v1505
    %v1670 = vpack.c.b16 %v1510, %v1506
    %v1671 = vpack.c.b16 %v1511, %v1507
    %v1672 = vpack.c.b16 %v1516, %v1512
    %v1673 = vpack.c.b16 %v1517, %v1513
    %v1674 = vpack.c.b16 %v1518, %v1514
    %v1675 = vpack.c.b16 %v1519, %v1515
    %v1676 = vpack.c.b16 %v1524, %v1520
    %v1677 = vpack.c.b16 %v1525, %v1521
    %v1678 = vpack.c.b16 %v1526, %v1522
    %v1679 = vpack.c.b16 %v1527, %v1523
    %v1680 = vpack.c.b16 %v1532, %v1528
    %v1681 = vpack.c.b16 %v1533, %v1529
    %v1682 = vpack.c.b16 %v1534, %v1530
    %v1683 = vpack.c.b16 %v1535, %v1531
    %v1684 = vpack.c.b16 %v1540, %v1536
    %v1685 = vpack.c.b16 %v1541, %v1537
    %v1686 = vpack.c.b16 %v1542, %v1538
    %v1687 = vpack.c.b16 %v1543, %v1539
    %v1688 = vpack.c.b16 %v1548, %v1544
    %v1689 = vpack.c.b16 %v1549, %v1545
    %v1690 = vpack.c.b16 %v1550, %v1546
    %v1691 = vpack.c.b16 %v1551, %v1547
    %v1692 = vpack.c.b16 %v1556, %v1552
    %v1693 = vpack.c.b16 %v1557, %v1553
    %v1694 = vpack.c.b16 %v1558, %v1554
    %v1695 = vpack.c.b16 %v1559, %v1555
    %v1696 = vpack.c.b16 %v1564, %v1560
    %v1697 = vpack.c.b16 %v1565, %v1561
    %v1698 = vpack.c.b16 %v1566, %v1562
    %v1699 = vpack.c.b16 %v1567, %v1563
    %v1700 = vpack.c.b16 %v1572, %v1568
    %v1701 = vpack.c.b16 %v1573, %v1569
    %v1702 = vpack.c.b16 %v1574, %v1570
    %v1703 = vpack.c.b16 %v1575, %v1571
    %1832 = vmatprep.subr.bf16.mxu0 %v1577
    %1833 = vmatpush1.bf16.msra.mxu0 %v1576
    %1834 = vmatprep.subr.bf16.mxu0 %v1581
    %1835 = vmatpush1.bf16.msra.mxu0 %v1580
    %1836 = vmatprep.subr.bf16.mxu0 %v1585
    %1837 = vmatpush1.bf16.msra.mxu0 %v1584
    %1838 = vmatprep.subr.bf16.mxu0 %v1589
    %1839 = vmatpush1.bf16.msra.mxu0 %v1588
    %1840 = vmatprep.subr.bf16.mxu0 %v1593
    %1841 = vmatpush1.bf16.msra.mxu0 %v1592
    %1842 = vmatprep.subr.bf16.mxu0 %v1597
    %1843 = vmatpush1.bf16.msra.mxu0 %v1596
    %1844 = vmatprep.subr.bf16.mxu0 %v1601
    %1845 = vmatpush1.bf16.msra.mxu0 %v1600
    %1846 = vmatprep.subr.bf16.mxu0 %v1605
    %1847 = vmatpush1.bf16.msra.mxu0 %v1604
    %1848 = vmatprep.subr.bf16.mxu0 %v1609
    %1849 = vmatpush1.bf16.msra.mxu0 %v1608
    %1850 = vmatprep.subr.bf16.mxu0 %v1613
    %1851 = vmatpush1.bf16.msra.mxu0 %v1612
    %1852 = vmatprep.subr.bf16.mxu0 %v1617
    %1853 = vmatpush1.bf16.msra.mxu0 %v1616
    %1854 = vmatprep.subr.bf16.mxu0 %v1621
    %1855 = vmatpush1.bf16.msra.mxu0 %v1620
    %1856 = vmatprep.subr.bf16.mxu0 %v1625
    %1857 = vmatpush1.bf16.msra.mxu0 %v1624
    %1858 = vmatprep.subr.bf16.mxu0 %v1629
    %1859 = vmatpush1.bf16.msra.mxu0 %v1628
    %1860 = vmatprep.subr.bf16.mxu0 %v1633
    %1861 = vmatpush1.bf16.msra.mxu0 %v1632
    %1862 = vmatprep.subr.bf16.mxu0 %v1637
    %1863 = vmatpush1.bf16.msra.mxu0 %v1636
    %1864 = vmatprep.mubr.bf16.mxu0 %v1037
    %1865 = vmatmul.mubr.bf16.gmra.mrb[0].mxu0 %v1036
    %v1866 = vpop.f32.mrb[0].mxu0
    %v1867 = vadd.f32 %v1175, %v1866
    %v1868 = vpop.f32.mrb[0].mxu0
    %v1869 = vadd.f32 %v1179, %v1868
    %v1870 = vpop.f32.mrb[0].mxu0
    %v1871 = vadd.f32 %v1175, %v1870
    %v1872 = vpop.f32.mrb[0].mxu0
    %v1873 = vadd.f32 %v1179, %v1872
    %1874 = vdwg.mxu0
    %1875 = vmatprep.subr.bf16.mxu0 %v1641
    %1876 = vmatpush1.bf16.msra.mxu0 %v1640
    %1877 = vmatprep.subr.bf16.mxu0 %v1645
    %1878 = vmatpush1.bf16.msra.mxu0 %v1644
    %1879 = vmatprep.subr.bf16.mxu0 %v1649
    %1880 = vmatpush1.bf16.msra.mxu0 %v1648
    %1881 = vmatprep.subr.bf16.mxu0 %v1653
    %1882 = vmatpush1.bf16.msra.mxu0 %v1652
    %1883 = vmatprep.subr.bf16.mxu0 %v1657
    %1884 = vmatpush1.bf16.msra.mxu0 %v1656
    %1885 = vmatprep.subr.bf16.mxu0 %v1661
    %1886 = vmatpush1.bf16.msra.mxu0 %v1660
    %1887 = vmatprep.subr.bf16.mxu0 %v1665
    %1888 = vmatpush1.bf16.msra.mxu0 %v1664
    %1889 = vmatprep.subr.bf16.mxu0 %v1669
    %1890 = vmatpush1.bf16.msra.mxu0 %v1668
    %1891 = vmatprep.subr.bf16.mxu0 %v1673
    %1892 = vmatpush1.bf16.msra.mxu0 %v1672
    %1893 = vmatprep.subr.bf16.mxu0 %v1677
    %1894 = vmatpush1.bf16.msra.mxu0 %v1676
    %1895 = vmatprep.subr.bf16.mxu0 %v1681
    %1896 = vmatpush1.bf16.msra.mxu0 %v1680
    %1897 = vmatprep.subr.bf16.mxu0 %v1685
    %1898 = vmatpush1.bf16.msra.mxu0 %v1684
    %1899 = vmatprep.subr.bf16.mxu0 %v1689
    %1900 = vmatpush1.bf16.msra.mxu0 %v1688
    %1901 = vmatprep.subr.bf16.mxu0 %v1693
    %1902 = vmatpush1.bf16.msra.mxu0 %v1692
    %1903 = vmatprep.subr.bf16.mxu0 %v1697
    %1904 = vmatpush1.bf16.msra.mxu0 %v1696
    %1905 = vmatprep.subr.bf16.mxu0 %v1701
    %1906 = vmatpush1.bf16.msra.mxu0 %v1700
    %1907 = vmatprep.mubr.bf16.mxu0 %v1039
    %1908 = vmatmul.mubr.bf16.gmra.mrb[0].mxu0 %v1038
    %v1909 = vpop.f32.mrb[0].mxu0
    %v1910 = vadd.f32 %v1867, %v1909
    %v1911 = vpop.f32.mrb[0].mxu0
    %v1912 = vadd.f32 %v1869, %v1911
    %v1913 = vpop.f32.mrb[0].mxu0
    %v1914 = vadd.f32 %v1871, %v1913
    %v1915 = vpop.f32.mrb[0].mxu0
    %v1916 = vadd.f32 %v1873, %v1915
    %1917 = vdwg.mxu0
    %1918 = vmatprep.subr.bf16.mxu0 %v1579
    %1919 = vmatpush1.bf16.msra.mxu0 %v1578
    %1920 = vmatprep.subr.bf16.mxu0 %v1583
    %1921 = vmatpush1.bf16.msra.mxu0 %v1582
    %1922 = vmatprep.subr.bf16.mxu0 %v1587
    %1923 = vmatpush1.bf16.msra.mxu0 %v1586
    %1924 = vmatprep.subr.bf16.mxu0 %v1591
    %1925 = vmatpush1.bf16.msra.mxu0 %v1590
    %1926 = vmatprep.subr.bf16.mxu0 %v1595
    %1927 = vmatpush1.bf16.msra.mxu0 %v1594
    %1928 = vmatprep.subr.bf16.mxu0 %v1599
    %1929 = vmatpush1.bf16.msra.mxu0 %v1598
    %1930 = vmatprep.subr.bf16.mxu0 %v1603
    %1931 = vmatpush1.bf16.msra.mxu0 %v1602
    %1932 = vmatprep.subr.bf16.mxu0 %v1607
    %1933 = vmatpush1.bf16.msra.mxu0 %v1606
    %1934 = vmatprep.subr.bf16.mxu0 %v1611
    %1935 = vmatpush1.bf16.msra.mxu0 %v1610
    %1936 = vmatprep.subr.bf16.mxu0 %v1615
    %1937 = vmatpush1.bf16.msra.mxu0 %v1614
    %1938 = vmatprep.subr.bf16.mxu0 %v1619
    %1939 = vmatpush1.bf16.msra.mxu0 %v1618
    %1940 = vmatprep.subr.bf16.mxu0 %v1623
    %1941 = vmatpush1.bf16.msra.mxu0 %v1622
    %1942 = vmatprep.subr.bf16.mxu0 %v1627
    %1943 = vmatpush1.bf16.msra.mxu0 %v1626
    %1944 = vmatprep.subr.bf16.mxu0 %v1631
    %1945 = vmatpush1.bf16.msra.mxu0 %v1630
    %1946 = vmatprep.subr.bf16.mxu0 %v1635
    %1947 = vmatpush1.bf16.msra.mxu0 %v1634
    %1948 = vmatprep.subr.bf16.mxu0 %v1639
    %1949 = vmatpush1.bf16.msra.mxu0 %v1638
    %1950 = vmatprep.mubr.bf16.mxu0 %v1037
    %1951 = vmatmul.mubr.bf16.gmra.mrb[0].mxu0 %v1036
    %v1952 = vpop.f32.mrb[0].mxu0
    %v1953 = vadd.f32 %v1183, %v1952
    %v1954 = vpop.f32.mrb[0].mxu0
    %v1955 = vadd.f32 %v1187, %v1954
    %v1956 = vpop.f32.mrb[0].mxu0
    %v1957 = vadd.f32 %v1183, %v1956
    %v1958 = vpop.f32.mrb[0].mxu0
    %v1959 = vadd.f32 %v1187, %v1958
    %1960 = vdwg.mxu0
    %1961 = vmatprep.subr.bf16.mxu0 %v1643
    %1962 = vmatpush1.bf16.msra.mxu0 %v1642
    %1963 = vmatprep.subr.bf16.mxu0 %v1647
    %1964 = vmatpush1.bf16.msra.mxu0 %v1646
    %1965 = vmatprep.subr.bf16.mxu0 %v1651
    %1966 = vmatpush1.bf16.msra.mxu0 %v1650
    %1967 = vmatprep.subr.bf16.mxu0 %v1655
    %1968 = vmatpush1.bf16.msra.mxu0 %v1654
    %1969 = vmatprep.subr.bf16.mxu0 %v1659
    %1970 = vmatpush1.bf16.msra.mxu0 %v1658
    %1971 = vmatprep.subr.bf16.mxu0 %v1663
    %1972 = vmatpush1.bf16.msra.mxu0 %v1662
    %1973 = vmatprep.subr.bf16.mxu0 %v1667
    %1974 = vmatpush1.bf16.msra.mxu0 %v1666
    %1975 = vmatprep.subr.bf16.mxu0 %v1671
    %1976 = vmatpush1.bf16.msra.mxu0 %v1670
    %1977 = vmatprep.subr.bf16.mxu0 %v1675
    %1978 = vmatpush1.bf16.msra.mxu0 %v1674
    %1979 = vmatprep.subr.bf16.mxu0 %v1679
    %1980 = vmatpush1.bf16.msra.mxu0 %v1678
    %1981 = vmatprep.subr.bf16.mxu0 %v1683
    %1982 = vmatpush1.bf16.msra.mxu0 %v1682
    %1983 = vmatprep.subr.bf16.mxu0 %v1687
    %1984 = vmatpush1.bf16.msra.mxu0 %v1686
    %1985 = vmatprep.subr.bf16.mxu0 %v1691
    %1986 = vmatpush1.bf16.msra.mxu0 %v1690
    %1987 = vmatprep.subr.bf16.mxu0 %v1695
    %1988 = vmatpush1.bf16.msra.mxu0 %v1694
    %1989 = vmatprep.subr.bf16.mxu0 %v1699
    %1990 = vmatpush1.bf16.msra.mxu0 %v1698
    %1991 = vmatprep.subr.bf16.mxu0 %v1703
    %1992 = vmatpush1.bf16.msra.mxu0 %v1702
    %1993 = vmatprep.mubr.bf16.mxu0 %v1039
    %1994 = vmatmul.mubr.bf16.gmra.mrb[0].mxu0 %v1038
    %v1995 = vpop.f32.mrb[0].mxu0
    %v1996 = vadd.f32 %v1953, %v1995
    %v1997 = vpop.f32.mrb[0].mxu0
    %v1998 = vadd.f32 %v1955, %v1997
    %v1999 = vpop.f32.mrb[0].mxu0
    %v2000 = vadd.f32 %v1957, %v1999
    %v2001 = vpop.f32.mrb[0].mxu0
    %v2002 = vadd.f32 %v1959, %v2001
    %2003 = vdwg.mxu0
    %v2004 = vmax.f32 %v1910, 0.0
    %v2005 = vmax.f32 %v1912, 0.0
    %v2006 = vmax.f32 %v1996, 0.0
    %v2007 = vmax.f32 %v1998, 0.0
    %v2008 = vmax.f32 %v1914, 0.0
    %v2009 = vmax.f32 %v1916, 0.0
    %v2010 = vmax.f32 %v2000, 0.0
    %v2011 = vmax.f32 %v2002, 0.0
    %v2012 = vpack.c.bf16 %v2008, %v2004
    %v2013 = vpack.c.bf16 %v2009, %v2005
    %v2014 = vpack.c.bf16 %v2010, %v2006
    %v2015 = vpack.c.bf16 %v2011, %v2007
    %s2016 = scalar_lea.vmem [#allocation5], 2048
    %v2017 = vld [vmem:[%s2016] sm:$0xff]
    %v2018 = vld [vmem:[%s2016 + $0x8] sm:$0xff]
    %v2019 = vld [vmem:[%s2016 + $0x10] sm:$0xff]
    %v2020 = vld [vmem:[%s2016 + $0x18] sm:$0xff]
    %v2021 = vld [vmem:[%s2016 + $0x20] sm:$0xff]
    %v2022 = vld [vmem:[%s2016 + $0x28] sm:$0xff]
    %v2023 = vld [vmem:[%s2016 + $0x30] sm:$0xff]
    %v2024 = vld [vmem:[%s2016 + $0x38] sm:$0xff]
    %v2025 = vld [vmem:[%s2016 + $0x40] sm:$0xff]
    %v2026 = vld [vmem:[%s2016 + $0x48] sm:$0xff]
    %v2027 = vld [vmem:[%s2016 + $0x50] sm:$0xff]
    %v2028 = vld [vmem:[%s2016 + $0x58] sm:$0xff]
    %v2029 = vld [vmem:[%s2016 + $0x60] sm:$0xff]
    %v2030 = vld [vmem:[%s2016 + $0x68] sm:$0xff]
    %v2031 = vld [vmem:[%s2016 + $0x70] sm:$0xff]
    %v2032 = vld [vmem:[%s2016 + $0x78] sm:$0xff]
    %v2033 = vld [vmem:[%s2016 + $0x80] sm:$0xff]
    %v2034 = vld [vmem:[%s2016 + $0x88] sm:$0xff]
    %v2035 = vld [vmem:[%s2016 + $0x90] sm:$0xff]
    %v2036 = vld [vmem:[%s2016 + $0x98] sm:$0xff]
    %v2037 = vld [vmem:[%s2016 + $0xa0] sm:$0xff]
    %v2038 = vld [vmem:[%s2016 + $0xa8] sm:$0xff]
    %v2039 = vld [vmem:[%s2016 + $0xb0] sm:$0xff]
    %v2040 = vld [vmem:[%s2016 + $0xb8] sm:$0xff]
    %v2041 = vld [vmem:[%s2016 + $0xc0] sm:$0xff]
    %v2042 = vld [vmem:[%s2016 + $0xc8] sm:$0xff]
    %v2043 = vld [vmem:[%s2016 + $0xd0] sm:$0xff]
    %v2044 = vld [vmem:[%s2016 + $0xd8] sm:$0xff]
    %v2045 = vld [vmem:[%s2016 + $0xe0] sm:$0xff]
    %v2046 = vld [vmem:[%s2016 + $0xe8] sm:$0xff]
    %v2047 = vld [vmem:[%s2016 + $0xf0] sm:$0xff]
    %v2048 = vld [vmem:[%s2016 + $0xf8] sm:$0xff]
    %v2049 = vld [vmem:[%s2016 + $0x100] sm:$0xff]
    %v2050 = vld [vmem:[%s2016 + $0x108] sm:$0xff]
    %v2051 = vld [vmem:[%s2016 + $0x110] sm:$0xff]
    %v2052 = vld [vmem:[%s2016 + $0x118] sm:$0xff]
    %v2053 = vld [vmem:[%s2016 + $0x120] sm:$0xff]
    %v2054 = vld [vmem:[%s2016 + $0x128] sm:$0xff]
    %v2055 = vld [vmem:[%s2016 + $0x130] sm:$0xff]
    %v2056 = vld [vmem:[%s2016 + $0x138] sm:$0xff]
    %v2057 = vld [vmem:[%s2016 + $0x140] sm:$0xff]
    %v2058 = vld [vmem:[%s2016 + $0x148] sm:$0xff]
    %v2059 = vld [vmem:[%s2016 + $0x150] sm:$0xff]
    %v2060 = vld [vmem:[%s2016 + $0x158] sm:$0xff]
    %v2061 = vld [vmem:[%s2016 + $0x160] sm:$0xff]
    %v2062 = vld [vmem:[%s2016 + $0x168] sm:$0xff]
    %v2063 = vld [vmem:[%s2016 + $0x170] sm:$0xff]
    %v2064 = vld [vmem:[%s2016 + $0x178] sm:$0xff]
    %v2065 = vld [vmem:[%s2016 + $0x180] sm:$0xff]
    %v2066 = vld [vmem:[%s2016 + $0x188] sm:$0xff]
    %v2067 = vld [vmem:[%s2016 + $0x190] sm:$0xff]
    %v2068 = vld [vmem:[%s2016 + $0x198] sm:$0xff]
    %v2069 = vld [vmem:[%s2016 + $0x1a0] sm:$0xff]
    %v2070 = vld [vmem:[%s2016 + $0x1a8] sm:$0xff]
    %v2071 = vld [vmem:[%s2016 + $0x1b0] sm:$0xff]
    %v2072 = vld [vmem:[%s2016 + $0x1b8] sm:$0xff]
    %v2073 = vld [vmem:[%s2016 + $0x1c0] sm:$0xff]
    %v2074 = vld [vmem:[%s2016 + $0x1c8] sm:$0xff]
    %v2075 = vld [vmem:[%s2016 + $0x1d0] sm:$0xff]
    %v2076 = vld [vmem:[%s2016 + $0x1d8] sm:$0xff]
    %v2077 = vld [vmem:[%s2016 + $0x1e0] sm:$0xff]
    %v2078 = vld [vmem:[%s2016 + $0x1e8] sm:$0xff]
    %v2079 = vld [vmem:[%s2016 + $0x1f0] sm:$0xff]
    %v2080 = vld [vmem:[%s2016 + $0x1f8] sm:$0xff]
    %v2081 = vld [vmem:[%s2016 + $0x200] sm:$0xff]
    %v2082 = vld [vmem:[%s2016 + $0x208] sm:$0xff]
    %v2083 = vld [vmem:[%s2016 + $0x210] sm:$0xff]
    %v2084 = vld [vmem:[%s2016 + $0x218] sm:$0xff]
    %v2085 = vld [vmem:[%s2016 + $0x220] sm:$0xff]
    %v2086 = vld [vmem:[%s2016 + $0x228] sm:$0xff]
    %v2087 = vld [vmem:[%s2016 + $0x230] sm:$0xff]
    %v2088 = vld [vmem:[%s2016 + $0x238] sm:$0xff]
    %v2089 = vld [vmem:[%s2016 + $0x240] sm:$0xff]
    %v2090 = vld [vmem:[%s2016 + $0x248] sm:$0xff]
    %v2091 = vld [vmem:[%s2016 + $0x250] sm:$0xff]
    %v2092 = vld [vmem:[%s2016 + $0x258] sm:$0xff]
    %v2093 = vld [vmem:[%s2016 + $0x260] sm:$0xff]
    %v2094 = vld [vmem:[%s2016 + $0x268] sm:$0xff]
    %v2095 = vld [vmem:[%s2016 + $0x270] sm:$0xff]
    %v2096 = vld [vmem:[%s2016 + $0x278] sm:$0xff]
    %v2097 = vld [vmem:[%s2016 + $0x280] sm:$0xff]
    %v2098 = vld [vmem:[%s2016 + $0x288] sm:$0xff]
    %v2099 = vld [vmem:[%s2016 + $0x290] sm:$0xff]
    %v2100 = vld [vmem:[%s2016 + $0x298] sm:$0xff]
    %v2101 = vld [vmem:[%s2016 + $0x2a0] sm:$0xff]
    %v2102 = vld [vmem:[%s2016 + $0x2a8] sm:$0xff]
    %v2103 = vld [vmem:[%s2016 + $0x2b0] sm:$0xff]
    %v2104 = vld [vmem:[%s2016 + $0x2b8] sm:$0xff]
    %v2105 = vld [vmem:[%s2016 + $0x2c0] sm:$0xff]
    %v2106 = vld [vmem:[%s2016 + $0x2c8] sm:$0xff]
    %v2107 = vld [vmem:[%s2016 + $0x2d0] sm:$0xff]
    %v2108 = vld [vmem:[%s2016 + $0x2d8] sm:$0xff]
    %v2109 = vld [vmem:[%s2016 + $0x2e0] sm:$0xff]
    %v2110 = vld [vmem:[%s2016 + $0x2e8] sm:$0xff]
    %v2111 = vld [vmem:[%s2016 + $0x2f0] sm:$0xff]
    %v2112 = vld [vmem:[%s2016 + $0x2f8] sm:$0xff]
    %v2113 = vld [vmem:[%s2016 + $0x300] sm:$0xff]
    %v2114 = vld [vmem:[%s2016 + $0x308] sm:$0xff]
    %v2115 = vld [vmem:[%s2016 + $0x310] sm:$0xff]
    %v2116 = vld [vmem:[%s2016 + $0x318] sm:$0xff]
    %v2117 = vld [vmem:[%s2016 + $0x320] sm:$0xff]
    %v2118 = vld [vmem:[%s2016 + $0x328] sm:$0xff]
    %v2119 = vld [vmem:[%s2016 + $0x330] sm:$0xff]
    %v2120 = vld [vmem:[%s2016 + $0x338] sm:$0xff]
    %v2121 = vld [vmem:[%s2016 + $0x340] sm:$0xff]
    %v2122 = vld [vmem:[%s2016 + $0x348] sm:$0xff]
    %v2123 = vld [vmem:[%s2016 + $0x350] sm:$0xff]
    %v2124 = vld [vmem:[%s2016 + $0x358] sm:$0xff]
    %v2125 = vld [vmem:[%s2016 + $0x360] sm:$0xff]
    %v2126 = vld [vmem:[%s2016 + $0x368] sm:$0xff]
    %v2127 = vld [vmem:[%s2016 + $0x370] sm:$0xff]
    %v2128 = vld [vmem:[%s2016 + $0x378] sm:$0xff]
    %v2129 = vld [vmem:[%s2016 + $0x380] sm:$0xff]
    %v2130 = vld [vmem:[%s2016 + $0x388] sm:$0xff]
    %v2131 = vld [vmem:[%s2016 + $0x390] sm:$0xff]
    %v2132 = vld [vmem:[%s2016 + $0x398] sm:$0xff]
    %v2133 = vld [vmem:[%s2016 + $0x3a0] sm:$0xff]
    %v2134 = vld [vmem:[%s2016 + $0x3a8] sm:$0xff]
    %v2135 = vld [vmem:[%s2016 + $0x3b0] sm:$0xff]
    %v2136 = vld [vmem:[%s2016 + $0x3b8] sm:$0xff]
    %v2137 = vld [vmem:[%s2016 + $0x3c0] sm:$0xff]
    %v2138 = vld [vmem:[%s2016 + $0x3c8] sm:$0xff]
    %v2139 = vld [vmem:[%s2016 + $0x3d0] sm:$0xff]
    %v2140 = vld [vmem:[%s2016 + $0x3d8] sm:$0xff]
    %v2141 = vld [vmem:[%s2016 + $0x3e0] sm:$0xff]
    %v2142 = vld [vmem:[%s2016 + $0x3e8] sm:$0xff]
    %v2143 = vld [vmem:[%s2016 + $0x3f0] sm:$0xff]
    %v2144 = vld [vmem:[%s2016 + $0x3f8] sm:$0xff]
    %s2145 = scalar_lea.vmem [#allocation7], 2
    %v2146 = vld [vmem:[%s2145] ss:$4 sm:$0xf]
    %v2148 = vlaneseq
    %v2149 = vshrl.u32 %v2148, 7
    %v2150 = vsub.s32 0, %v2149
    %v2151 = vrot.slane %v2146, %v2150
    %v2152 = vlaneseq
    %v2153 = vshrl.u32 %v2152, 7
    %v2154 = vsub.s32 1, %v2153
    %v2155 = vrot.slane %v2146, %v2154
    %v2156 = vlaneseq
    %v2157 = vshrl.u32 %v2156, 7
    %v2158 = vsub.s32 2, %v2157
    %v2159 = vrot.slane %v2146, %v2158
    %v2160 = vlaneseq
    %v2161 = vshrl.u32 %v2160, 7
    %v2162 = vsub.s32 3, %v2161
    %v2163 = vrot.slane %v2146, %v2162
    %v2296 = vunpack.c.l.b16 %v2017
    %v2297 = vunpack.c.h.b16 %v2017
    %v2298 = vunpack.c.l.b16 %v2018
    %v2299 = vunpack.c.h.b16 %v2018
    %v2300 = vunpack.c.l.b16 %v2019
    %v2301 = vunpack.c.h.b16 %v2019
    %v2302 = vunpack.c.l.b16 %v2020
    %v2303 = vunpack.c.h.b16 %v2020
    %v2304 = vunpack.c.l.b16 %v2021
    %v2305 = vunpack.c.h.b16 %v2021
    %v2306 = vunpack.c.l.b16 %v2022
    %v2307 = vunpack.c.h.b16 %v2022
    %v2308 = vunpack.c.l.b16 %v2023
    %v2309 = vunpack.c.h.b16 %v2023
    %v2310 = vunpack.c.l.b16 %v2024
    %v2311 = vunpack.c.h.b16 %v2024
    %v2312 = vunpack.c.l.b16 %v2025
    %v2313 = vunpack.c.h.b16 %v2025
    %v2314 = vunpack.c.l.b16 %v2026
    %v2315 = vunpack.c.h.b16 %v2026
    %v2316 = vunpack.c.l.b16 %v2027
    %v2317 = vunpack.c.h.b16 %v2027
    %v2318 = vunpack.c.l.b16 %v2028
    %v2319 = vunpack.c.h.b16 %v2028
    %v2320 = vunpack.c.l.b16 %v2029
    %v2321 = vunpack.c.h.b16 %v2029
    %v2322 = vunpack.c.l.b16 %v2030
    %v2323 = vunpack.c.h.b16 %v2030
    %v2324 = vunpack.c.l.b16 %v2031
    %v2325 = vunpack.c.h.b16 %v2031
    %v2326 = vunpack.c.l.b16 %v2032
    %v2327 = vunpack.c.h.b16 %v2032
    %v2328 = vunpack.c.l.b16 %v2033
    %v2329 = vunpack.c.h.b16 %v2033
    %v2330 = vunpack.c.l.b16 %v2034
    %v2331 = vunpack.c.h.b16 %v2034
    %v2332 = vunpack.c.l.b16 %v2035
    %v2333 = vunpack.c.h.b16 %v2035
    %v2334 = vunpack.c.l.b16 %v2036
    %v2335 = vunpack.c.h.b16 %v2036
    %v2336 = vunpack.c.l.b16 %v2037
    %v2337 = vunpack.c.h.b16 %v2037
    %v2338 = vunpack.c.l.b16 %v2038
    %v2339 = vunpack.c.h.b16 %v2038
    %v2340 = vunpack.c.l.b16 %v2039
    %v2341 = vunpack.c.h.b16 %v2039
    %v2342 = vunpack.c.l.b16 %v2040
    %v2343 = vunpack.c.h.b16 %v2040
    %v2344 = vunpack.c.l.b16 %v2041
    %v2345 = vunpack.c.h.b16 %v2041
    %v2346 = vunpack.c.l.b16 %v2042
    %v2347 = vunpack.c.h.b16 %v2042
    %v2348 = vunpack.c.l.b16 %v2043
    %v2349 = vunpack.c.h.b16 %v2043
    %v2350 = vunpack.c.l.b16 %v2044
    %v2351 = vunpack.c.h.b16 %v2044
    %v2352 = vunpack.c.l.b16 %v2045
    %v2353 = vunpack.c.h.b16 %v2045
    %v2354 = vunpack.c.l.b16 %v2046
    %v2355 = vunpack.c.h.b16 %v2046
    %v2356 = vunpack.c.l.b16 %v2047
    %v2357 = vunpack.c.h.b16 %v2047
    %v2358 = vunpack.c.l.b16 %v2048
    %v2359 = vunpack.c.h.b16 %v2048
    %v2360 = vunpack.c.l.b16 %v2049
    %v2361 = vunpack.c.h.b16 %v2049
    %v2362 = vunpack.c.l.b16 %v2050
    %v2363 = vunpack.c.h.b16 %v2050
    %v2364 = vunpack.c.l.b16 %v2051
    %v2365 = vunpack.c.h.b16 %v2051
    %v2366 = vunpack.c.l.b16 %v2052
    %v2367 = vunpack.c.h.b16 %v2052
    %v2368 = vunpack.c.l.b16 %v2053
    %v2369 = vunpack.c.h.b16 %v2053
    %v2370 = vunpack.c.l.b16 %v2054
    %v2371 = vunpack.c.h.b16 %v2054
    %v2372 = vunpack.c.l.b16 %v2055
    %v2373 = vunpack.c.h.b16 %v2055
    %v2374 = vunpack.c.l.b16 %v2056
    %v2375 = vunpack.c.h.b16 %v2056
    %v2376 = vunpack.c.l.b16 %v2057
    %v2377 = vunpack.c.h.b16 %v2057
    %v2378 = vunpack.c.l.b16 %v2058
    %v2379 = vunpack.c.h.b16 %v2058
    %v2380 = vunpack.c.l.b16 %v2059
    %v2381 = vunpack.c.h.b16 %v2059
    %v2382 = vunpack.c.l.b16 %v2060
    %v2383 = vunpack.c.h.b16 %v2060
    %v2384 = vunpack.c.l.b16 %v2061
    %v2385 = vunpack.c.h.b16 %v2061
    %v2386 = vunpack.c.l.b16 %v2062
    %v2387 = vunpack.c.h.b16 %v2062
    %v2388 = vunpack.c.l.b16 %v2063
    %v2389 = vunpack.c.h.b16 %v2063
    %v2390 = vunpack.c.l.b16 %v2064
    %v2391 = vunpack.c.h.b16 %v2064
    %v2392 = vunpack.c.l.b16 %v2065
    %v2393 = vunpack.c.h.b16 %v2065
    %v2394 = vunpack.c.l.b16 %v2066
    %v2395 = vunpack.c.h.b16 %v2066
    %v2396 = vunpack.c.l.b16 %v2067
    %v2397 = vunpack.c.h.b16 %v2067
    %v2398 = vunpack.c.l.b16 %v2068
    %v2399 = vunpack.c.h.b16 %v2068
    %v2400 = vunpack.c.l.b16 %v2069
    %v2401 = vunpack.c.h.b16 %v2069
    %v2402 = vunpack.c.l.b16 %v2070
    %v2403 = vunpack.c.h.b16 %v2070
    %v2404 = vunpack.c.l.b16 %v2071
    %v2405 = vunpack.c.h.b16 %v2071
    %v2406 = vunpack.c.l.b16 %v2072
    %v2407 = vunpack.c.h.b16 %v2072
    %v2408 = vunpack.c.l.b16 %v2073
    %v2409 = vunpack.c.h.b16 %v2073
    %v2410 = vunpack.c.l.b16 %v2074
    %v2411 = vunpack.c.h.b16 %v2074
    %v2412 = vunpack.c.l.b16 %v2075
    %v2413 = vunpack.c.h.b16 %v2075
    %v2414 = vunpack.c.l.b16 %v2076
    %v2415 = vunpack.c.h.b16 %v2076
    %v2416 = vunpack.c.l.b16 %v2077
    %v2417 = vunpack.c.h.b16 %v2077
    %v2418 = vunpack.c.l.b16 %v2078
    %v2419 = vunpack.c.h.b16 %v2078
    %v2420 = vunpack.c.l.b16 %v2079
    %v2421 = vunpack.c.h.b16 %v2079
    %v2422 = vunpack.c.l.b16 %v2080
    %v2423 = vunpack.c.h.b16 %v2080
    %v2424 = vunpack.c.l.b16 %v2081
    %v2425 = vunpack.c.h.b16 %v2081
    %v2426 = vunpack.c.l.b16 %v2082
    %v2427 = vunpack.c.h.b16 %v2082
    %v2428 = vunpack.c.l.b16 %v2083
    %v2429 = vunpack.c.h.b16 %v2083
    %v2430 = vunpack.c.l.b16 %v2084
    %v2431 = vunpack.c.h.b16 %v2084
    %v2432 = vunpack.c.l.b16 %v2085
    %v2433 = vunpack.c.h.b16 %v2085
    %v2434 = vunpack.c.l.b16 %v2086
    %v2435 = vunpack.c.h.b16 %v2086
    %v2436 = vunpack.c.l.b16 %v2087
    %v2437 = vunpack.c.h.b16 %v2087
    %v2438 = vunpack.c.l.b16 %v2088
    %v2439 = vunpack.c.h.b16 %v2088
    %v2440 = vunpack.c.l.b16 %v2089
    %v2441 = vunpack.c.h.b16 %v2089
    %v2442 = vunpack.c.l.b16 %v2090
    %v2443 = vunpack.c.h.b16 %v2090
    %v2444 = vunpack.c.l.b16 %v2091
    %v2445 = vunpack.c.h.b16 %v2091
    %v2446 = vunpack.c.l.b16 %v2092
    %v2447 = vunpack.c.h.b16 %v2092
    %v2448 = vunpack.c.l.b16 %v2093
    %v2449 = vunpack.c.h.b16 %v2093
    %v2450 = vunpack.c.l.b16 %v2094
    %v2451 = vunpack.c.h.b16 %v2094
    %v2452 = vunpack.c.l.b16 %v2095
    %v2453 = vunpack.c.h.b16 %v2095
    %v2454 = vunpack.c.l.b16 %v2096
    %v2455 = vunpack.c.h.b16 %v2096
    %v2456 = vunpack.c.l.b16 %v2097
    %v2457 = vunpack.c.h.b16 %v2097
    %v2458 = vunpack.c.l.b16 %v2098
    %v2459 = vunpack.c.h.b16 %v2098
    %v2460 = vunpack.c.l.b16 %v2099
    %v2461 = vunpack.c.h.b16 %v2099
    %v2462 = vunpack.c.l.b16 %v2100
    %v2463 = vunpack.c.h.b16 %v2100
    %v2464 = vunpack.c.l.b16 %v2101
    %v2465 = vunpack.c.h.b16 %v2101
    %v2466 = vunpack.c.l.b16 %v2102
    %v2467 = vunpack.c.h.b16 %v2102
    %v2468 = vunpack.c.l.b16 %v2103
    %v2469 = vunpack.c.h.b16 %v2103
    %v2470 = vunpack.c.l.b16 %v2104
    %v2471 = vunpack.c.h.b16 %v2104
    %v2472 = vunpack.c.l.b16 %v2105
    %v2473 = vunpack.c.h.b16 %v2105
    %v2474 = vunpack.c.l.b16 %v2106
    %v2475 = vunpack.c.h.b16 %v2106
    %v2476 = vunpack.c.l.b16 %v2107
    %v2477 = vunpack.c.h.b16 %v2107
    %v2478 = vunpack.c.l.b16 %v2108
    %v2479 = vunpack.c.h.b16 %v2108
    %v2480 = vunpack.c.l.b16 %v2109
    %v2481 = vunpack.c.h.b16 %v2109
    %v2482 = vunpack.c.l.b16 %v2110
    %v2483 = vunpack.c.h.b16 %v2110
    %v2484 = vunpack.c.l.b16 %v2111
    %v2485 = vunpack.c.h.b16 %v2111
    %v2486 = vunpack.c.l.b16 %v2112
    %v2487 = vunpack.c.h.b16 %v2112
    %v2488 = vunpack.c.l.b16 %v2113
    %v2489 = vunpack.c.h.b16 %v2113
    %v2490 = vunpack.c.l.b16 %v2114
    %v2491 = vunpack.c.h.b16 %v2114
    %v2492 = vunpack.c.l.b16 %v2115
    %v2493 = vunpack.c.h.b16 %v2115
    %v2494 = vunpack.c.l.b16 %v2116
    %v2495 = vunpack.c.h.b16 %v2116
    %v2496 = vunpack.c.l.b16 %v2117
    %v2497 = vunpack.c.h.b16 %v2117
    %v2498 = vunpack.c.l.b16 %v2118
    %v2499 = vunpack.c.h.b16 %v2118
    %v2500 = vunpack.c.l.b16 %v2119
    %v2501 = vunpack.c.h.b16 %v2119
    %v2502 = vunpack.c.l.b16 %v2120
    %v2503 = vunpack.c.h.b16 %v2120
    %v2504 = vunpack.c.l.b16 %v2121
    %v2505 = vunpack.c.h.b16 %v2121
    %v2506 = vunpack.c.l.b16 %v2122
    %v2507 = vunpack.c.h.b16 %v2122
    %v2508 = vunpack.c.l.b16 %v2123
    %v2509 = vunpack.c.h.b16 %v2123
    %v2510 = vunpack.c.l.b16 %v2124
    %v2511 = vunpack.c.h.b16 %v2124
    %v2512 = vunpack.c.l.b16 %v2125
    %v2513 = vunpack.c.h.b16 %v2125
    %v2514 = vunpack.c.l.b16 %v2126
    %v2515 = vunpack.c.h.b16 %v2126
    %v2516 = vunpack.c.l.b16 %v2127
    %v2517 = vunpack.c.h.b16 %v2127
    %v2518 = vunpack.c.l.b16 %v2128
    %v2519 = vunpack.c.h.b16 %v2128
    %v2520 = vunpack.c.l.b16 %v2129
    %v2521 = vunpack.c.h.b16 %v2129
    %v2522 = vunpack.c.l.b16 %v2130
    %v2523 = vunpack.c.h.b16 %v2130
    %v2524 = vunpack.c.l.b16 %v2131
    %v2525 = vunpack.c.h.b16 %v2131
    %v2526 = vunpack.c.l.b16 %v2132
    %v2527 = vunpack.c.h.b16 %v2132
    %v2528 = vunpack.c.l.b16 %v2133
    %v2529 = vunpack.c.h.b16 %v2133
    %v2530 = vunpack.c.l.b16 %v2134
    %v2531 = vunpack.c.h.b16 %v2134
    %v2532 = vunpack.c.l.b16 %v2135
    %v2533 = vunpack.c.h.b16 %v2135
    %v2534 = vunpack.c.l.b16 %v2136
    %v2535 = vunpack.c.h.b16 %v2136
    %v2536 = vunpack.c.l.b16 %v2137
    %v2537 = vunpack.c.h.b16 %v2137
    %v2538 = vunpack.c.l.b16 %v2138
    %v2539 = vunpack.c.h.b16 %v2138
    %v2540 = vunpack.c.l.b16 %v2139
    %v2541 = vunpack.c.h.b16 %v2139
    %v2542 = vunpack.c.l.b16 %v2140
    %v2543 = vunpack.c.h.b16 %v2140
    %v2544 = vunpack.c.l.b16 %v2141
    %v2545 = vunpack.c.h.b16 %v2141
    %v2546 = vunpack.c.l.b16 %v2142
    %v2547 = vunpack.c.h.b16 %v2142
    %v2548 = vunpack.c.l.b16 %v2143
    %v2549 = vunpack.c.h.b16 %v2143
    %v2550 = vunpack.c.l.b16 %v2144
    %v2551 = vunpack.c.h.b16 %v2144
    %v2552 = vpack.c.b16 %v2300, %v2296
    %v2553 = vpack.c.b16 %v2301, %v2297
    %v2554 = vpack.c.b16 %v2302, %v2298
    %v2555 = vpack.c.b16 %v2303, %v2299
    %v2556 = vpack.c.b16 %v2308, %v2304
    %v2557 = vpack.c.b16 %v2309, %v2305
    %v2558 = vpack.c.b16 %v2310, %v2306
    %v2559 = vpack.c.b16 %v2311, %v2307
    %v2560 = vpack.c.b16 %v2316, %v2312
    %v2561 = vpack.c.b16 %v2317, %v2313
    %v2562 = vpack.c.b16 %v2318, %v2314
    %v2563 = vpack.c.b16 %v2319, %v2315
    %v2564 = vpack.c.b16 %v2324, %v2320
    %v2565 = vpack.c.b16 %v2325, %v2321
    %v2566 = vpack.c.b16 %v2326, %v2322
    %v2567 = vpack.c.b16 %v2327, %v2323
    %v2568 = vpack.c.b16 %v2332, %v2328
    %v2569 = vpack.c.b16 %v2333, %v2329
    %v2570 = vpack.c.b16 %v2334, %v2330
    %v2571 = vpack.c.b16 %v2335, %v2331
    %v2572 = vpack.c.b16 %v2340, %v2336
    %v2573 = vpack.c.b16 %v2341, %v2337
    %v2574 = vpack.c.b16 %v2342, %v2338
    %v2575 = vpack.c.b16 %v2343, %v2339
    %v2576 = vpack.c.b16 %v2348, %v2344
    %v2577 = vpack.c.b16 %v2349, %v2345
    %v2578 = vpack.c.b16 %v2350, %v2346
    %v2579 = vpack.c.b16 %v2351, %v2347
    %v2580 = vpack.c.b16 %v2356, %v2352
    %v2581 = vpack.c.b16 %v2357, %v2353
    %v2582 = vpack.c.b16 %v2358, %v2354
    %v2583 = vpack.c.b16 %v2359, %v2355
    %v2584 = vpack.c.b16 %v2364, %v2360
    %v2585 = vpack.c.b16 %v2365, %v2361
    %v2586 = vpack.c.b16 %v2366, %v2362
    %v2587 = vpack.c.b16 %v2367, %v2363
    %v2588 = vpack.c.b16 %v2372, %v2368
    %v2589 = vpack.c.b16 %v2373, %v2369
    %v2590 = vpack.c.b16 %v2374, %v2370
    %v2591 = vpack.c.b16 %v2375, %v2371
    %v2592 = vpack.c.b16 %v2380, %v2376
    %v2593 = vpack.c.b16 %v2381, %v2377
    %v2594 = vpack.c.b16 %v2382, %v2378
    %v2595 = vpack.c.b16 %v2383, %v2379
    %v2596 = vpack.c.b16 %v2388, %v2384
    %v2597 = vpack.c.b16 %v2389, %v2385
    %v2598 = vpack.c.b16 %v2390, %v2386
    %v2599 = vpack.c.b16 %v2391, %v2387
    %v2600 = vpack.c.b16 %v2396, %v2392
    %v2601 = vpack.c.b16 %v2397, %v2393
    %v2602 = vpack.c.b16 %v2398, %v2394
    %v2603 = vpack.c.b16 %v2399, %v2395
    %v2604 = vpack.c.b16 %v2404, %v2400
    %v2605 = vpack.c.b16 %v2405, %v2401
    %v2606 = vpack.c.b16 %v2406, %v2402
    %v2607 = vpack.c.b16 %v2407, %v2403
    %v2608 = vpack.c.b16 %v2412, %v2408
    %v2609 = vpack.c.b16 %v2413, %v2409
    %v2610 = vpack.c.b16 %v2414, %v2410
    %v2611 = vpack.c.b16 %v2415, %v2411
    %v2612 = vpack.c.b16 %v2420, %v2416
    %v2613 = vpack.c.b16 %v2421, %v2417
    %v2614 = vpack.c.b16 %v2422, %v2418
    %v2615 = vpack.c.b16 %v2423, %v2419
    %v2616 = vpack.c.b16 %v2428, %v2424
    %v2617 = vpack.c.b16 %v2429, %v2425
    %v2618 = vpack.c.b16 %v2430, %v2426
    %v2619 = vpack.c.b16 %v2431, %v2427
    %v2620 = vpack.c.b16 %v2436, %v2432
    %v2621 = vpack.c.b16 %v2437, %v2433
    %v2622 = vpack.c.b16 %v2438, %v2434
    %v2623 = vpack.c.b16 %v2439, %v2435
    %v2624 = vpack.c.b16 %v2444, %v2440
    %v2625 = vpack.c.b16 %v2445, %v2441
    %v2626 = vpack.c.b16 %v2446, %v2442
    %v2627 = vpack.c.b16 %v2447, %v2443
    %v2628 = vpack.c.b16 %v2452, %v2448
    %v2629 = vpack.c.b16 %v2453, %v2449
    %v2630 = vpack.c.b16 %v2454, %v2450
    %v2631 = vpack.c.b16 %v2455, %v2451
    %v2632 = vpack.c.b16 %v2460, %v2456
    %v2633 = vpack.c.b16 %v2461, %v2457
    %v2634 = vpack.c.b16 %v2462, %v2458
    %v2635 = vpack.c.b16 %v2463, %v2459
    %v2636 = vpack.c.b16 %v2468, %v2464
    %v2637 = vpack.c.b16 %v2469, %v2465
    %v2638 = vpack.c.b16 %v2470, %v2466
    %v2639 = vpack.c.b16 %v2471, %v2467
    %v2640 = vpack.c.b16 %v2476, %v2472
    %v2641 = vpack.c.b16 %v2477, %v2473
    %v2642 = vpack.c.b16 %v2478, %v2474
    %v2643 = vpack.c.b16 %v2479, %v2475
    %v2644 = vpack.c.b16 %v2484, %v2480
    %v2645 = vpack.c.b16 %v2485, %v2481
    %v2646 = vpack.c.b16 %v2486, %v2482
    %v2647 = vpack.c.b16 %v2487, %v2483
    %v2648 = vpack.c.b16 %v2492, %v2488
    %v2649 = vpack.c.b16 %v2493, %v2489
    %v2650 = vpack.c.b16 %v2494, %v2490
    %v2651 = vpack.c.b16 %v2495, %v2491
    %v2652 = vpack.c.b16 %v2500, %v2496
    %v2653 = vpack.c.b16 %v2501, %v2497
    %v2654 = vpack.c.b16 %v2502, %v2498
    %v2655 = vpack.c.b16 %v2503, %v2499
    %v2656 = vpack.c.b16 %v2508, %v2504
    %v2657 = vpack.c.b16 %v2509, %v2505
    %v2658 = vpack.c.b16 %v2510, %v2506
    %v2659 = vpack.c.b16 %v2511, %v2507
    %v2660 = vpack.c.b16 %v2516, %v2512
    %v2661 = vpack.c.b16 %v2517, %v2513
    %v2662 = vpack.c.b16 %v2518, %v2514
    %v2663 = vpack.c.b16 %v2519, %v2515
    %v2664 = vpack.c.b16 %v2524, %v2520
    %v2665 = vpack.c.b16 %v2525, %v2521
    %v2666 = vpack.c.b16 %v2526, %v2522
    %v2667 = vpack.c.b16 %v2527, %v2523
    %v2668 = vpack.c.b16 %v2532, %v2528
    %v2669 = vpack.c.b16 %v2533, %v2529
    %v2670 = vpack.c.b16 %v2534, %v2530
    %v2671 = vpack.c.b16 %v2535, %v2531
    %v2672 = vpack.c.b16 %v2540, %v2536
    %v2673 = vpack.c.b16 %v2541, %v2537
    %v2674 = vpack.c.b16 %v2542, %v2538
    %v2675 = vpack.c.b16 %v2543, %v2539
    %v2676 = vpack.c.b16 %v2548, %v2544
    %v2677 = vpack.c.b16 %v2549, %v2545
    %v2678 = vpack.c.b16 %v2550, %v2546
    %v2679 = vpack.c.b16 %v2551, %v2547
    %2808 = vmatprep.subr.bf16.mxu0 %v2553
    %2809 = vmatpush1.bf16.msra.mxu0 %v2552
    %2810 = vmatprep.subr.bf16.mxu0 %v2557
    %2811 = vmatpush1.bf16.msra.mxu0 %v2556
    %2812 = vmatprep.subr.bf16.mxu0 %v2561
    %2813 = vmatpush1.bf16.msra.mxu0 %v2560
    %2814 = vmatprep.subr.bf16.mxu0 %v2565
    %2815 = vmatpush1.bf16.msra.mxu0 %v2564
    %2816 = vmatprep.subr.bf16.mxu0 %v2569
    %2817 = vmatpush1.bf16.msra.mxu0 %v2568
    %2818 = vmatprep.subr.bf16.mxu0 %v2573
    %2819 = vmatpush1.bf16.msra.mxu0 %v2572
    %2820 = vmatprep.subr.bf16.mxu0 %v2577
    %2821 = vmatpush1.bf16.msra.mxu0 %v2576
    %2822 = vmatprep.subr.bf16.mxu0 %v2581
    %2823 = vmatpush1.bf16.msra.mxu0 %v2580
    %2824 = vmatprep.subr.bf16.mxu0 %v2585
    %2825 = vmatpush1.bf16.msra.mxu0 %v2584
    %2826 = vmatprep.subr.bf16.mxu0 %v2589
    %2827 = vmatpush1.bf16.msra.mxu0 %v2588
    %2828 = vmatprep.subr.bf16.mxu0 %v2593
    %2829 = vmatpush1.bf16.msra.mxu0 %v2592
    %2830 = vmatprep.subr.bf16.mxu0 %v2597
    %2831 = vmatpush1.bf16.msra.mxu0 %v2596
    %2832 = vmatprep.subr.bf16.mxu0 %v2601
    %2833 = vmatpush1.bf16.msra.mxu0 %v2600
    %2834 = vmatprep.subr.bf16.mxu0 %v2605
    %2835 = vmatpush1.bf16.msra.mxu0 %v2604
    %2836 = vmatprep.subr.bf16.mxu0 %v2609
    %2837 = vmatpush1.bf16.msra.mxu0 %v2608
    %2838 = vmatprep.subr.bf16.mxu0 %v2613
    %2839 = vmatpush1.bf16.msra.mxu0 %v2612
    %2840 = vmatprep.mubr.bf16.mxu0 %v2013
    %2841 = vmatmul.mubr.bf16.gmra.mrb[0].mxu0 %v2012
    %v2842 = vpop.f32.mrb[0].mxu0
    %v2843 = vadd.f32 %v2151, %v2842
    %v2844 = vpop.f32.mrb[0].mxu0
    %v2845 = vadd.f32 %v2155, %v2844
    %v2846 = vpop.f32.mrb[0].mxu0
    %v2847 = vadd.f32 %v2151, %v2846
    %v2848 = vpop.f32.mrb[0].mxu0
    %v2849 = vadd.f32 %v2155, %v2848
    %2850 = vdwg.mxu0
    %2851 = vmatprep.subr.bf16.mxu0 %v2617
    %2852 = vmatpush1.bf16.msra.mxu0 %v2616
    %2853 = vmatprep.subr.bf16.mxu0 %v2621
    %2854 = vmatpush1.bf16.msra.mxu0 %v2620
    %2855 = vmatprep.subr.bf16.mxu0 %v2625
    %2856 = vmatpush1.bf16.msra.mxu0 %v2624
    %2857 = vmatprep.subr.bf16.mxu0 %v2629
    %2858 = vmatpush1.bf16.msra.mxu0 %v2628
    %2859 = vmatprep.subr.bf16.mxu0 %v2633
    %2860 = vmatpush1.bf16.msra.mxu0 %v2632
    %2861 = vmatprep.subr.bf16.mxu0 %v2637
    %2862 = vmatpush1.bf16.msra.mxu0 %v2636
    %2863 = vmatprep.subr.bf16.mxu0 %v2641
    %2864 = vmatpush1.bf16.msra.mxu0 %v2640
    %2865 = vmatprep.subr.bf16.mxu0 %v2645
    %2866 = vmatpush1.bf16.msra.mxu0 %v2644
    %2867 = vmatprep.subr.bf16.mxu0 %v2649
    %2868 = vmatpush1.bf16.msra.mxu0 %v2648
    %2869 = vmatprep.subr.bf16.mxu0 %v2653
    %2870 = vmatpush1.bf16.msra.mxu0 %v2652
    %2871 = vmatprep.subr.bf16.mxu0 %v2657
    %2872 = vmatpush1.bf16.msra.mxu0 %v2656
    %2873 = vmatprep.subr.bf16.mxu0 %v2661
    %2874 = vmatpush1.bf16.msra.mxu0 %v2660
    %2875 = vmatprep.subr.bf16.mxu0 %v2665
    %2876 = vmatpush1.bf16.msra.mxu0 %v2664
    %2877 = vmatprep.subr.bf16.mxu0 %v2669
    %2878 = vmatpush1.bf16.msra.mxu0 %v2668
    %2879 = vmatprep.subr.bf16.mxu0 %v2673
    %2880 = vmatpush1.bf16.msra.mxu0 %v2672
    %2881 = vmatprep.subr.bf16.mxu0 %v2677
    %2882 = vmatpush1.bf16.msra.mxu0 %v2676
    %2883 = vmatprep.mubr.bf16.mxu0 %v2015
    %2884 = vmatmul.mubr.bf16.gmra.mrb[0].mxu0 %v2014
    %v2885 = vpop.f32.mrb[0].mxu0
    %v2886 = vadd.f32 %v2843, %v2885
    %v2887 = vpop.f32.mrb[0].mxu0
    %v2888 = vadd.f32 %v2845, %v2887
    %v2889 = vpop.f32.mrb[0].mxu0
    %v2890 = vadd.f32 %v2847, %v2889
    %v2891 = vpop.f32.mrb[0].mxu0
    %v2892 = vadd.f32 %v2849, %v2891
    %2893 = vdwg.mxu0
    %2894 = vmatprep.subr.bf16.mxu0 %v2555
    %2895 = vmatpush1.bf16.msra.mxu0 %v2554
    %2896 = vmatprep.subr.bf16.mxu0 %v2559
    %2897 = vmatpush1.bf16.msra.mxu0 %v2558
    %2898 = vmatprep.subr.bf16.mxu0 %v2563
    %2899 = vmatpush1.bf16.msra.mxu0 %v2562
    %2900 = vmatprep.subr.bf16.mxu0 %v2567
    %2901 = vmatpush1.bf16.msra.mxu0 %v2566
    %2902 = vmatprep.subr.bf16.mxu0 %v2571
    %2903 = vmatpush1.bf16.msra.mxu0 %v2570
    %2904 = vmatprep.subr.bf16.mxu0 %v2575
    %2905 = vmatpush1.bf16.msra.mxu0 %v2574
    %2906 = vmatprep.subr.bf16.mxu0 %v2579
    %2907 = vmatpush1.bf16.msra.mxu0 %v2578
    %2908 = vmatprep.subr.bf16.mxu0 %v2583
    %2909 = vmatpush1.bf16.msra.mxu0 %v2582
    %2910 = vmatprep.subr.bf16.mxu0 %v2587
    %2911 = vmatpush1.bf16.msra.mxu0 %v2586
    %2912 = vmatprep.subr.bf16.mxu0 %v2591
    %2913 = vmatpush1.bf16.msra.mxu0 %v2590
    %2914 = vmatprep.subr.bf16.mxu0 %v2595
    %2915 = vmatpush1.bf16.msra.mxu0 %v2594
    %2916 = vmatprep.subr.bf16.mxu0 %v2599
    %2917 = vmatpush1.bf16.msra.mxu0 %v2598
    %2918 = vmatprep.subr.bf16.mxu0 %v2603
    %2919 = vmatpush1.bf16.msra.mxu0 %v2602
    %2920 = vmatprep.subr.bf16.mxu0 %v2607
    %2921 = vmatpush1.bf16.msra.mxu0 %v2606
    %2922 = vmatprep.subr.bf16.mxu0 %v2611
    %2923 = vmatpush1.bf16.msra.mxu0 %v2610
    %2924 = vmatprep.subr.bf16.mxu0 %v2615
    %2925 = vmatpush1.bf16.msra.mxu0 %v2614
    %2926 = vmatprep.mubr.bf16.mxu0 %v2013
    %2927 = vmatmul.mubr.bf16.gmra.mrb[0].mxu0 %v2012
    %v2928 = vpop.f32.mrb[0].mxu0
    %v2929 = vadd.f32 %v2159, %v2928
    %v2930 = vpop.f32.mrb[0].mxu0
    %v2931 = vadd.f32 %v2163, %v2930
    %v2932 = vpop.f32.mrb[0].mxu0
    %v2933 = vadd.f32 %v2159, %v2932
    %v2934 = vpop.f32.mrb[0].mxu0
    %v2935 = vadd.f32 %v2163, %v2934
    %2936 = vdwg.mxu0
    %2937 = vmatprep.subr.bf16.mxu0 %v2619
    %2938 = vmatpush1.bf16.msra.mxu0 %v2618
    %2939 = vmatprep.subr.bf16.mxu0 %v2623
    %2940 = vmatpush1.bf16.msra.mxu0 %v2622
    %2941 = vmatprep.subr.bf16.mxu0 %v2627
    %2942 = vmatpush1.bf16.msra.mxu0 %v2626
    %2943 = vmatprep.subr.bf16.mxu0 %v2631
    %2944 = vmatpush1.bf16.msra.mxu0 %v2630
    %2945 = vmatprep.subr.bf16.mxu0 %v2635
    %2946 = vmatpush1.bf16.msra.mxu0 %v2634
    %2947 = vmatprep.subr.bf16.mxu0 %v2639
    %2948 = vmatpush1.bf16.msra.mxu0 %v2638
    %2949 = vmatprep.subr.bf16.mxu0 %v2643
    %2950 = vmatpush1.bf16.msra.mxu0 %v2642
    %2951 = vmatprep.subr.bf16.mxu0 %v2647
    %2952 = vmatpush1.bf16.msra.mxu0 %v2646
    %2953 = vmatprep.subr.bf16.mxu0 %v2651
    %2954 = vmatpush1.bf16.msra.mxu0 %v2650
    %2955 = vmatprep.subr.bf16.mxu0 %v2655
    %2956 = vmatpush1.bf16.msra.mxu0 %v2654
    %2957 = vmatprep.subr.bf16.mxu0 %v2659
    %2958 = vmatpush1.bf16.msra.mxu0 %v2658
    %2959 = vmatprep.subr.bf16.mxu0 %v2663
    %2960 = vmatpush1.bf16.msra.mxu0 %v2662
    %2961 = vmatprep.subr.bf16.mxu0 %v2667
    %2962 = vmatpush1.bf16.msra.mxu0 %v2666
    %2963 = vmatprep.subr.bf16.mxu0 %v2671
    %2964 = vmatpush1.bf16.msra.mxu0 %v2670
    %2965 = vmatprep.subr.bf16.mxu0 %v2675
    %2966 = vmatpush1.bf16.msra.mxu0 %v2674
    %2967 = vmatprep.subr.bf16.mxu0 %v2679
    %2968 = vmatpush1.bf16.msra.mxu0 %v2678
    %2969 = vmatprep.mubr.bf16.mxu0 %v2015
    %2970 = vmatmul.mubr.bf16.gmra.mrb[0].mxu0 %v2014
    %v2971 = vpop.f32.mrb[0].mxu0
    %v2972 = vadd.f32 %v2929, %v2971
    %v2973 = vpop.f32.mrb[0].mxu0
    %v2974 = vadd.f32 %v2931, %v2973
    %v2975 = vpop.f32.mrb[0].mxu0
    %v2976 = vadd.f32 %v2933, %v2975
    %v2977 = vpop.f32.mrb[0].mxu0
    %v2978 = vadd.f32 %v2935, %v2977
    %2979 = vdwg.mxu0
    %v2980 = vmax.f32 %v2886, 0.0
    %v2981 = vmax.f32 %v2888, 0.0
    %v2982 = vmax.f32 %v2972, 0.0
    %v2983 = vmax.f32 %v2974, 0.0
    %v2984 = vmax.f32 %v2890, 0.0
    %v2985 = vmax.f32 %v2892, 0.0
    %v2986 = vmax.f32 %v2976, 0.0
    %v2987 = vmax.f32 %v2978, 0.0
    %2988 = vst [vmem:[#allocation8] sm:$0xff] %v2980
    %2989 = vst [vmem:[#allocation8 + $0x8] sm:$0xff] %v2981
    %2990 = vst [vmem:[#allocation8 + $0x10] sm:$0xff] %v2982
    %2991 = vst [vmem:[#allocation8 + $0x18] sm:$0xff] %v2983
    %2992 = vst [vmem:[#allocation8 + $0x20] sm:$0xff] %v2984
    %2993 = vst [vmem:[#allocation8 + $0x28] sm:$0xff] %v2985
    %2994 = vst [vmem:[#allocation8 + $0x30] sm:$0xff] %v2986
    %2995 = vst [vmem:[#allocation8 + $0x38] sm:$0xff] %v2987
    // Predicated region
    $region26: #{tpu_custom_call.1} parent=1 // pred_check
      _
    $region27: #{tpu_custom_call.1} parent=1 // pred_check_branch
      %2997 = sbr.rel (0) target = $region29
    $region28: #{tpu_custom_call.1} parent=1 // pred_region
      %s2999 = ssub.s32 1024, 1024
      %3000 = vsyncadd [#allocation4], %s2999
      %s3001 = sshll.u32 [#allocation8], 4
      %s3002 = int_to_ptr.vmem [resolvable:$true] %s3001
      %3007 = dma.vmem_to_hbm [thread:$0]  %s3002, 1024, %s3, [#allocation4], 512, 512, 32
    $region29: #{tpu_custom_call.1} parent=1 // pred_fallthru
      _
    // Predicated region
    $region30: #{tpu_custom_call.1} parent=1 // pred_check
      _
    $region31: #{tpu_custom_call.1} parent=1 // pred_check_branch
      %3009 = sbr.rel (0) target = $region33
    $region32: #{tpu_custom_call.1} parent=1 // pred_region
      %3010 = dma.done [#allocation4], 1024
    $region33: #{tpu_custom_call.1} parent=1 // pred_fallthru
      _
    %3011 = vsyncpa [#allocation3], 1
    %3012 = vsyncpa [#allocation6], 1
    %3013 = vsyncpa [#allocation4], 1

</llo_original>
